<compile_context>
chip_gen: v6e
topology: v6e:2x2x1
jax: 0.10.0
libtpu: 0.0.40
codegen_flags: <defaults>
</compile_context>

<pallas_src>
import jax
import jax.numpy as jnp
from jax.experimental import pallas as pl
from jax.experimental.pallas import tpu as pltpu


# ----------------------------------------------------------------------------- helpers

def _layer_dims(input_dim, output_dim):
    return [(input_dim, 256), (256, 512), (512, 1024), (1024, output_dim)]


def _round_up(n, m):
    return ((n + m - 1) // m) * m


def _output_tiling(output_dim):
    """(tn, padded_N): lane-dense (multiple of 128) output tiling for fc4."""
    padded = _round_up(output_dim, 128)
    if padded <= 2048:          # small outputs: single fully-resident N tile
        tn = padded
    else:                       # image-sized outputs: tile W4 / output over N
        tn = 1024
        padded = _round_up(padded, tn)
    return tn, padded


def _default_bf16_epilogue():
    """bf16 bias+leaky_relu epilogue on chips with a bf16 VPU (v6e/v7x)."""
    try:
        kind = jax.devices()[0].device_kind.lower()
    except Exception:
        return True
    return "v5" not in kind  # v5e/v5p: keep the f32 epilogue (no bf16 VPU)


def _vmem_limit_bytes(tm, tn, input_dim):
    """Footprint-derived scoped-VMEM budget (capped at 48 MiB for v7x)."""
    w123 = (input_dim * 256 + 256 * 512 + 512 * 1024) * 2 * 2  # bf16, x2 double buffer
    w4 = 1024 * tn * 2 * 2                                     # bf16 W4 tile, x2
    b = (256 + 512 + 1024 + tn) * 4 * 2                        # biases (<= f32), x2
    x_t = tm * input_dim * 2 * 2                               # bf16 input tile, x2
    o_t = tm * tn * 4 * 2                                      # f32 output tile, x2
    h3 = tm * 1024 * 2                                         # bf16 h3 scratch
    act = tm * (256 + 512 + 1024) * 4                          # worst-case live f32 acts
    margin = 16 << 20                                          # compiler scratch headroom
    total = w123 + w4 + b + x_t + o_t + h3 + act + margin
    return min(_round_up(total, 1 << 20), 48 << 20)


# ----------------------------------------------------------------------------- kernel

def _make_kernel(bf16_epilogue):
    if bf16_epilogue:
        # One f32->bf16 cast, bf16 bias add, bf16 maximum (VPU packs 2 elem/lane).
        def _epilogue(acc_f32, b_ref):
            h = acc_f32.astype(jnp.bfloat16) + b_ref[...]
            return jnp.maximum(h, 0.2 * h)
    else:
        # v5-class: f32 add + maximum (no select), then one downcast for the MXU.
        def _epilogue(acc_f32, b_ref):
            h = acc_f32 + b_ref[...]
            return jnp.maximum(h, 0.2 * h).astype(jnp.bfloat16)

    def kernel(x_ref,
               w1_ref, b1_ref,
               w2_ref, b2_ref,
               w3_ref, b3_ref,
               w4_ref, b4_ref,
               o_ref,
               h3_ref):
        # fc1-fc3 only once per batch tile (n == 0); h3 cached in VMEM scratch.
        @pl.when(pl.program_id(1) == 0)
        def _():
            h = jnp.dot(x_ref[...], w1_ref[...],
                        preferred_element_type=jnp.float32)
            h = _epilogue(h, b1_ref)
            h = jnp.dot(h, w2_ref[...], preferred_element_type=jnp.float32)
            h = _epilogue(h, b2_ref)
            h = jnp.dot(h, w3_ref[...], preferred_element_type=jnp.float32)
            h = _epilogue(h, b3_ref)
            h3_ref[...] = h

        # fc4 on the current output (N) tile + tanh.
        acc = jnp.dot(h3_ref[...], w4_ref[...],
                      preferred_element_type=jnp.float32)
        o_ref[...] = jnp.tanh(acc + b4_ref[...]).astype(o_ref.dtype)

    return kernel


# ----------------------------------------------------------------------------- wrapper

def prepare_generator_params(params, *, bf16_epilogue=None):
    """One-time conversion: bf16 weights, epilogue-dtype biases, lane-dense W4/b4."""
    if bf16_epilogue is None:
        bf16_epilogue = _default_bf16_epilogue()
    (w1, b1), (w2, b2), (w3, b3), (w4, b4) = (
        params["fc1"], params["fc2"], params["fc3"], params["fc4"])
    output_dim = w4.shape[1]
    tn, padded_N = _output_tiling(output_dim)
    if padded_N != output_dim:  # zero-pad fc4 columns to a lane-dense multiple of 128
        w4 = jnp.pad(w4, ((0, 0), (0, padded_N - output_dim)))
        b4 = jnp.pad(b4, ((0, 0), (0, padded_N - output_dim)))
    hb_dt = jnp.bfloat16 if bf16_epilogue else jnp.float32
    return {
        "weights": tuple(w.astype(jnp.bfloat16) for w in (w1, w2, w3, w4)),
        "biases": (b1.astype(hb_dt), b2.astype(hb_dt), b3.astype(hb_dt),
                   b4.astype(jnp.float32)),
        "bf16_epilogue": bool(bf16_epilogue),
        "output_dim": int(output_dim),
        "tn": int(tn),
    }


def generator_forward(x, prepared, *, tm=1024):
    """x: [B, input_dim] float32. prepared: output of prepare_generator_params."""
    B, input_dim = x.shape
    w1, w2, w3, w4 = prepared["weights"]
    b1, b2, b3, b4 = prepared["biases"]
    output_dim = prepared["output_dim"]
    tn = prepared["tn"]
    padded_N = w4.shape[1]

    # Batch tile: multiple of 16 (bf16 sublane packing).  When the batch is big
    # enough, cap the tile so the "parallel" batch axis has >= 2 grid steps so
    # both v7x TensorCores get work.
    tm_eff = min(tm, _round_up(B, 16))
    if B >= 32:
        tm_eff = min(tm_eff, _round_up((B + 1) // 2, 16))
    padded_B = _round_up(B, tm_eff)

    # Input cast to bf16 (adds ~0.4% relative input quantization on top of the
    # bf16 weights; well inside the check tolerance below).
    x_bf16 = x.astype(jnp.bfloat16)
    if padded_B != B:
        x_bf16 = jnp.pad(x_bf16, ((0, padded_B - B), (0, 0)))

    grid = (padded_B // tm_eff, padded_N // tn)
    resident = lambda shape: pl.BlockSpec(shape, lambda i, n: (0, 0))  # DMA'd once

    out = pl.pallas_call(
        _make_kernel(prepared["bf16_epilogue"]),
        out_shape=jax.ShapeDtypeStruct((padded_B, padded_N), jnp.float32),
        grid_spec=pltpu.PrefetchScalarGridSpec(
            num_scalar_prefetch=0,
            grid=grid,
            in_specs=[
                pl.BlockSpec((tm_eff, input_dim), lambda i, n: (i, 0)),  # x tile
                resident(w1.shape), resident(b1.shape),
                resident(w2.shape), resident(b2.shape),
                resident(w3.shape), resident(b3.shape),
                pl.BlockSpec((1024, tn), lambda i, n: (0, n)),           # W4 N-tile
                pl.BlockSpec((1, tn), lambda i, n: (0, n)),              # b4 N-tile
            ],
            out_specs=pl.BlockSpec((tm_eff, tn), lambda i, n: (i, n)),
            scratch_shapes=[pltpu.VMEM((tm_eff, 1024), jnp.bfloat16)],   # cached h3
        ),
        compiler_params=pltpu.CompilerParams(
            dimension_semantics=("parallel", "arbitrary"),
            vmem_limit_bytes=_vmem_limit_bytes(tm_eff, tn, input_dim),
        ),
    )(x_bf16, w1, b1, w2, b2, w3, b3, w4, b4)

    return out[:B, :output_dim]


# ----------------------------------------------------------------------------- init / reference

def init_generator_params(key, input_dim, output_dim, std=0.01):
    """Deterministic init matching nn.init.normal_(param, mean=0, std=0.01)."""
    names = ["fc1", "fc2", "fc3", "fc4"]
    params = {}
    for name, (d_in, d_out) in zip(names, _layer_dims(input_dim, output_dim)):
        key, kw, kb = jax.random.split(key, 3)
        # Weight stored as [in, out] (= PyTorch W.T); bias kept 2D [1, out].
        w = std * jax.random.normal(kw, (d_in, d_out), dtype=jnp.float32)
        b = std * jax.random.normal(kb, (1, d_out), dtype=jnp.float32)
        params[name] = (w, b)
    return params


def generator_reference(x, params):
    """Pure-JAX f32 reference for correctness checking."""
    h = x
    for name in ["fc1", "fc2", "fc3"]:
        w, b = params[name]
        h = h @ w + b
        h = jnp.where(h > 0, h, 0.2 * h)
    w, b = params["fc4"]
    return jnp.tanh(h @ w + b)


if __name__ == "__main__":
    key = jax.random.PRNGKey(0)
    k_param, k_x = jax.random.split(key)

    batch, input_dim, output_dim = 16, 64, 128
    params = init_generator_params(k_param, input_dim, output_dim)
    prepared = prepare_generator_params(params)
    x = jax.random.normal(k_x, (batch, input_dim), dtype=jnp.float32)

    out = jax.block_until_ready(generator_forward(x, prepared))
    ref = generator_reference(x, params)

    assert out.shape == (batch, output_dim)
    # bf16 MXU operands / bf16 epilogue with f32 accumulation vs pure-f32 ref.
    assert jnp.allclose(out, ref, atol=2e-3, rtol=2e-2), "mismatch vs reference"

    print("KERNEL_OK")
</pallas_src>

<mosaic_0001>
module attributes {stable_mosaic.version = 11 : i64} {
  func.func @kernel(%arg0: i32, %arg1: i32, %arg2: memref<16x64xbf16, #tpu.memory_space<vmem>>, %arg3: memref<64x256xbf16, #tpu.memory_space<vmem>>, %arg4: memref<1x256xbf16, #tpu.memory_space<vmem>>, %arg5: memref<256x512xbf16, #tpu.memory_space<vmem>>, %arg6: memref<1x512xbf16, #tpu.memory_space<vmem>>, %arg7: memref<512x1024xbf16, #tpu.memory_space<vmem>>, %arg8: memref<1x1024xbf16, #tpu.memory_space<vmem>>, %arg9: memref<1024x128xbf16, #tpu.memory_space<vmem>>, %arg10: memref<1x128xf32, #tpu.memory_space<vmem>>, %arg11: memref<16x128xf32, #tpu.memory_space<vmem>>, %arg12: memref<16x1024xbf16, #tpu.memory_space<vmem>>) attributes {dimension_semantics = [#tpu.dimension_semantics<parallel>, #tpu.dimension_semantics<arbitrary>], iteration_bounds = array<i64: 1, 1>, scalar_prefetch = 0 : i64, scratch_operands = 1 : i64, tpu.core_type = #tpu.core_type<tc>, window_params = [{transform_indices = @transform_0, window_bounds = array<i64: 16, 64>}, {pipeline_mode = #tpu.pipeline_mode<synchronous>, transform_indices = @transform_1, window_bounds = array<i64: 64, 256>}, {pipeline_mode = #tpu.pipeline_mode<synchronous>, transform_indices = @transform_2, window_bounds = array<i64: 1, 256>}, {pipeline_mode = #tpu.pipeline_mode<synchronous>, transform_indices = @transform_3, window_bounds = array<i64: 256, 512>}, {pipeline_mode = #tpu.pipeline_mode<synchronous>, transform_indices = @transform_4, window_bounds = array<i64: 1, 512>}, {pipeline_mode = #tpu.pipeline_mode<synchronous>, transform_indices = @transform_5, window_bounds = array<i64: 512, 1024>}, {pipeline_mode = #tpu.pipeline_mode<synchronous>, transform_indices = @transform_6, window_bounds = array<i64: 1, 1024>}, {transform_indices = @transform_7, window_bounds = array<i64: 1024, 128>}, {transform_indices = @transform_8, window_bounds = array<i64: 1, 128>}, {transform_indices = @transform_9, window_bounds = array<i64: 16, 128>}]} {
    %c0_i32 = arith.constant 0 : i32
    %0 = arith.cmpi eq, %arg1, %c0_i32 : i32
    %1 = arith.extui %0 : i1 to i32
    %c0_i32_0 = arith.constant 0 : i32
    %2 = arith.cmpi ne, %1, %c0_i32_0 : i32
    scf.if %2 {
      %c0_8 = arith.constant 0 : index
      %c0_9 = arith.constant 0 : index
      %11 = vector.load %arg2[%c0_8, %c0_9] : memref<16x64xbf16, #tpu.memory_space<vmem>>, vector<16x64xbf16>
      %c0_10 = arith.constant 0 : index
      %c0_11 = arith.constant 0 : index
      %12 = vector.load %arg3[%c0_10, %c0_11] : memref<64x256xbf16, #tpu.memory_space<vmem>>, vector<64x256xbf16>
      %cst_12 = arith.constant dense<0.000000e+00> : vector<16x256xf32>
      %13 = tpu.matmul %11, %12, %cst_12 {dimension_numbers = #tpu.dot_dimension_numbers<[1], [0], [0], [1], [0, 0, 1, 1], [], []>} : vector<16x64xbf16>, vector<64x256xbf16>, vector<16x256xf32> -> vector<16x256xf32>
      %14 = arith.truncf %13 : vector<16x256xf32> to vector<16x256xbf16>
      %c0_13 = arith.constant 0 : index
      %c0_14 = arith.constant 0 : index
      %15 = vector.load %arg4[%c0_13, %c0_14] : memref<1x256xbf16, #tpu.memory_space<vmem>>, vector<1x256xbf16>
      %16 = vector.broadcast %15 : vector<1x256xbf16> to vector<16x256xbf16>
      %17 = arith.addf %14, %16 : vector<16x256xbf16>
      %cst_15 = arith.constant 2.001950e-01 : bf16
      %18 = vector.broadcast %cst_15 : bf16 to vector<16x256xbf16>
      %19 = arith.mulf %18, %17 : vector<16x256xbf16>
      %20 = arith.maximumf %17, %19 : vector<16x256xbf16>
      %c0_16 = arith.constant 0 : index
      %c0_17 = arith.constant 0 : index
      %21 = vector.load %arg5[%c0_16, %c0_17] : memref<256x512xbf16, #tpu.memory_space<vmem>>, vector<256x512xbf16>
      %cst_18 = arith.constant dense<0.000000e+00> : vector<16x512xf32>
      %22 = tpu.matmul %20, %21, %cst_18 {dimension_numbers = #tpu.dot_dimension_numbers<[1], [0], [0], [1], [0, 0, 1, 1], [], []>} : vector<16x256xbf16>, vector<256x512xbf16>, vector<16x512xf32> -> vector<16x512xf32>
      %23 = arith.truncf %22 : vector<16x512xf32> to vector<16x512xbf16>
      %c0_19 = arith.constant 0 : index
      %c0_20 = arith.constant 0 : index
      %24 = vector.load %arg6[%c0_19, %c0_20] : memref<1x512xbf16, #tpu.memory_space<vmem>>, vector<1x512xbf16>
      %25 = vector.broadcast %24 : vector<1x512xbf16> to vector<16x512xbf16>
      %26 = arith.addf %23, %25 : vector<16x512xbf16>
      %cst_21 = arith.constant 2.001950e-01 : bf16
      %27 = vector.broadcast %cst_21 : bf16 to vector<16x512xbf16>
      %28 = arith.mulf %27, %26 : vector<16x512xbf16>
      %29 = arith.maximumf %26, %28 : vector<16x512xbf16>
      %c0_22 = arith.constant 0 : index
      %c0_23 = arith.constant 0 : index
      %30 = vector.load %arg7[%c0_22, %c0_23] : memref<512x1024xbf16, #tpu.memory_space<vmem>>, vector<512x1024xbf16>
      %cst_24 = arith.constant dense<0.000000e+00> : vector<16x1024xf32>
      %31 = tpu.matmul %29, %30, %cst_24 {dimension_numbers = #tpu.dot_dimension_numbers<[1], [0], [0], [1], [0, 0, 1, 1], [], []>} : vector<16x512xbf16>, vector<512x1024xbf16>, vector<16x1024xf32> -> vector<16x1024xf32>
      %32 = arith.truncf %31 : vector<16x1024xf32> to vector<16x1024xbf16>
      %c0_25 = arith.constant 0 : index
      %c0_26 = arith.constant 0 : index
      %33 = vector.load %arg8[%c0_25, %c0_26] : memref<1x1024xbf16, #tpu.memory_space<vmem>>, vector<1x1024xbf16>
      %34 = vector.broadcast %33 : vector<1x1024xbf16> to vector<16x1024xbf16>
      %35 = arith.addf %32, %34 : vector<16x1024xbf16>
      %cst_27 = arith.constant 2.001950e-01 : bf16
      %36 = vector.broadcast %cst_27 : bf16 to vector<16x1024xbf16>
      %37 = arith.mulf %36, %35 : vector<16x1024xbf16>
      %38 = arith.maximumf %35, %37 : vector<16x1024xbf16>
      %c0_28 = arith.constant 0 : index
      %c0_29 = arith.constant 0 : index
      %39 = vector.load %arg12[%c0_28, %c0_29] : memref<16x1024xbf16, #tpu.memory_space<vmem>>, vector<16x1024xbf16>
      tpu.vector_store %arg12[%c0_28, %c0_29], %38 {strides = array<i32>} : memref<16x1024xbf16, #tpu.memory_space<vmem>>, vector<16x1024xbf16>,
    } else {
    }
    %c0 = arith.constant 0 : index
    %c0_1 = arith.constant 0 : index
    %3 = vector.load %arg12[%c0, %c0_1] : memref<16x1024xbf16, #tpu.memory_space<vmem>>, vector<16x1024xbf16>
    %c0_2 = arith.constant 0 : index
    %c0_3 = arith.constant 0 : index
    %4 = vector.load %arg9[%c0_2, %c0_3] : memref<1024x128xbf16, #tpu.memory_space<vmem>>, vector<1024x128xbf16>
    %cst = arith.constant dense<0.000000e+00> : vector<16x128xf32>
    %5 = tpu.matmul %3, %4, %cst {dimension_numbers = #tpu.dot_dimension_numbers<[1], [0], [0], [1], [0, 0, 1, 1], [], []>} : vector<16x1024xbf16>, vector<1024x128xbf16>, vector<16x128xf32> -> vector<16x128xf32>
    %c0_4 = arith.constant 0 : index
    %c0_5 = arith.constant 0 : index
    %6 = vector.load %arg10[%c0_4, %c0_5] : memref<1x128xf32, #tpu.memory_space<vmem>>, vector<1x128xf32>
    %7 = vector.broadcast %6 : vector<1x128xf32> to vector<16x128xf32>
    %8 = arith.addf %5, %7 : vector<16x128xf32>
    %9 = math.tanh %8 : vector<16x128xf32>
    %c0_6 = arith.constant 0 : index
    %c0_7 = arith.constant 0 : index
    %10 = vector.load %arg11[%c0_6, %c0_7] : memref<16x128xf32, #tpu.memory_space<vmem>>, vector<16x128xf32>
    tpu.vector_store %arg11[%c0_6, %c0_7], %9 {strides = array<i32>} : memref<16x128xf32, #tpu.memory_space<vmem>>, vector<16x128xf32>,
    return
  }
  func.func @transform_0(%arg0: i32, %arg1: i32) -> (i32, i32) {
    %c0_i32 = arith.constant 0 : i32
    %c0_i32_0 = arith.constant 0 : i32
    return %arg0, %c0_i32 : i32, i32
  }
  func.func @transform_1(%arg0: i32, %arg1: i32) -> (i32, i32) {
    %c0_i32 = arith.constant 0 : i32
    %c0_i32_0 = arith.constant 0 : i32
    %c0_i32_1 = arith.constant 0 : i32
    return %c0_i32, %c0_i32_0 : i32, i32
  }
  func.func @transform_2(%arg0: i32, %arg1: i32) -> (i32, i32) {
    %c0_i32 = arith.constant 0 : i32
    %c0_i32_0 = arith.constant 0 : i32
    %c0_i32_1 = arith.constant 0 : i32
    return %c0_i32, %c0_i32_0 : i32, i32
  }
  func.func @transform_3(%arg0: i32, %arg1: i32) -> (i32, i32) {
    %c0_i32 = arith.constant 0 : i32
    %c0_i32_0 = arith.constant 0 : i32
    %c0_i32_1 = arith.constant 0 : i32
    return %c0_i32, %c0_i32_0 : i32, i32
  }
  func.func @transform_4(%arg0: i32, %arg1: i32) -> (i32, i32) {
    %c0_i32 = arith.constant 0 : i32
    %c0_i32_0 = arith.constant 0 : i32
    %c0_i32_1 = arith.constant 0 : i32
    return %c0_i32, %c0_i32_0 : i32, i32
  }
  func.func @transform_5(%arg0: i32, %arg1: i32) -> (i32, i32) {
    %c0_i32 = arith.constant 0 : i32
    %c0_i32_0 = arith.constant 0 : i32
    %c0_i32_1 = arith.constant 0 : i32
    return %c0_i32, %c0_i32_0 : i32, i32
  }
  func.func @transform_6(%arg0: i32, %arg1: i32) -> (i32, i32) {
    %c0_i32 = arith.constant 0 : i32
    %c0_i32_0 = arith.constant 0 : i32
    %c0_i32_1 = arith.constant 0 : i32
    return %c0_i32, %c0_i32_0 : i32, i32
  }
  func.func @transform_7(%arg0: i32, %arg1: i32) -> (i32, i32) {
    %c0_i32 = arith.constant 0 : i32
    %c0_i32_0 = arith.constant 0 : i32
    return %c0_i32, %arg1 : i32, i32
  }
  func.func @transform_8(%arg0: i32, %arg1: i32) -> (i32, i32) {
    %c0_i32 = arith.constant 0 : i32
    %c0_i32_0 = arith.constant 0 : i32
    return %c0_i32, %arg1 : i32, i32
  }
  func.func @transform_9(%arg0: i32, %arg1: i32) -> (i32, i32) {
    %c0_i32 = arith.constant 0 : i32
    return %arg0, %arg1 : i32, i32
  }
}

</mosaic_0001>

<llo_original>
// kernel: tpu_custom_call.1
$region0: #{tpu_custom_call.1}
  #allocation0 [shape = 'u32[]', space=smem, size = 0x4, offset = 0x4, fixed_abs, tag = 'smem constant byte address 0x4 - core index']
  #allocation1 [shape = 'u32[144,128]{1,0:T(1,128)}', space=vmem, size = 0x12000, scoped, tag = 'internal scratch']
  #allocation2 [shape = 'bf16[16,1024]{1,0:T(8,128)(2,1)}', space=vmem, size = 0x8000, scoped, tag = 'scratch operand']
  %s0 = inlined_call_operand.hbm [shape: bf16[16,64], index: 0, kind: input, shape index: {}]
  %s1 = inlined_call_operand.hbm [shape: bf16[64,256], index: 1, kind: input, shape index: {}]
  %s2 = inlined_call_operand.vmem [shape: bf16[1,256], index: 2, kind: input, shape index: {}]
  %s3 = inlined_call_operand.hbm [shape: bf16[256,512], index: 3, kind: input, shape index: {}]
  %s4 = inlined_call_operand.hbm [shape: bf16[1,512], index: 4, kind: input, shape index: {}]
  %s5 = inlined_call_operand.hbm [shape: bf16[512,1024], index: 5, kind: input, shape index: {}]
  %s6 = inlined_call_operand.vmem [shape: bf16[1,1024], index: 6, kind: input, shape index: {}]
  %s7 = inlined_call_operand.hbm [shape: bf16[1024,128], index: 7, kind: input, shape index: {}]
  %s8 = inlined_call_operand.vmem [shape: f32[1,128], index: 8, kind: input, shape index: {}]
  %s9 = inlined_call_operand.hbm [shape: f32[16,128], index: 9, kind: output, shape index: {}]
  %s10 = sld [smem:[#allocation0]]
  $region74: #{tpu_custom_call.1} parent=0
    _
  %s12 = ssub.s32 1, %s10
  %s13 = scalar_select 0, %s12, %s10
  $region1: #{tpu_custom_call.1} parent=0
    #allocation3 [shape = 'u8[4096]{0}', space=vmem, size = 0x1000, scoped, tag = 'input window, operand 0, single buffered']
    #allocation4 [shape = 's32[1]{0}', space=sflag, size = 0x4, scoped, tag = 'scoped memory for tpu_custom_call.1']
    #allocation5 [shape = 's32[1]{0}', space=sflag, size = 0x4, scoped, tag = 'scoped memory for tpu_custom_call.1']
    #allocation6 [shape = 'u8[32768]{0}', space=vmem, size = 0x8000, scoped, tag = 'input window, operand 1, single buffered']
    #allocation7 [shape = 's32[1]{0}', space=sflag, size = 0x4, scoped, tag = 'scoped memory for tpu_custom_call.1']
    #allocation8 [shape = 'u8[262144]{0}', space=vmem, size = 0x40000, scoped, tag = 'input window, operand 3, single buffered']
    #allocation9 [shape = 'u8[2048]{0}', space=vmem, size = 0x800, scoped, tag = 'input window, operand 4, single buffered']
    #allocation10 [shape = 's32[1]{0}', space=sflag, size = 0x4, scoped, tag = 'scoped memory for tpu_custom_call.1']
    #allocation11 [shape = 'u8[1048576]{0}', space=vmem, size = 0x100000, scoped, tag = 'input window, operand 5, single buffered']
    #allocation12 [shape = 'u8[262144]{0}', space=vmem, size = 0x40000, scoped, tag = 'input window, operand 7, single buffered']
    #allocation13 [shape = 's32[1]{0}', space=sflag, size = 0x4, scoped, tag = 'scoped memory for tpu_custom_call.1']
    #allocation14 [shape = 'u8[8192]{0}', space=vmem, size = 0x2000, scoped, tag = 'output window, operand 0, single buffered']
    %14 = vsyncpa [#allocation4], 0
    %15 = vsyncpa [#allocation7], 0
    %16 = vsyncpa [#allocation10], 0
    %17 = vsyncpa [#allocation13], 0
    %18 = vsyncpa [#allocation5], 0
    // Predicated region
    $region2: #{tpu_custom_call.1} parent=1 // pred_check
      _
    $region3: #{tpu_custom_call.1} parent=1 // pred_check_branch
      %20 = sbr.rel (0) target = $region5
    $region4: #{tpu_custom_call.1} parent=1 // pred_region
      %s22 = ssub.s32 128, 128
      %23 = vsyncadd [#allocation4], %s22
      %s24 = sshll.u32 [#allocation3], 4
      %s25 = int_to_ptr.vmem [resolvable:$true] %s24
      %30 = dma.hbm_to_vmem [thread:$0]  %s0, 128, %s25, [#allocation4], 64, 64, 4
    $region5: #{tpu_custom_call.1} parent=1 // pred_fallthru
      _
    // Predicated region
    $region6: #{tpu_custom_call.1} parent=1 // pred_check
      _
    $region7: #{tpu_custom_call.1} parent=1 // pred_check_branch
      %32 = sbr.rel (0) target = $region9
    $region8: #{tpu_custom_call.1} parent=1 // pred_region
      %s34 = ssub.s32 1024, 1024
      %35 = vsyncadd [#allocation7], %s34
      %s36 = sshll.u32 [#allocation6], 4
      %s37 = int_to_ptr.vmem [resolvable:$true] %s36
      %42 = dma.hbm_to_vmem [thread:$0]  %s1, 1024, %s37, [#allocation7], 128, 128, 8
    $region9: #{tpu_custom_call.1} parent=1 // pred_fallthru
      _
    // Predicated region
    $region10: #{tpu_custom_call.1} parent=1 // pred_check
      _
    $region11: #{tpu_custom_call.1} parent=1 // pred_check_branch
      %44 = sbr.rel (0) target = $region13
    $region12: #{tpu_custom_call.1} parent=1 // pred_region
      _
    $region13: #{tpu_custom_call.1} parent=1 // pred_fallthru
      _
    // Predicated region
    $region14: #{tpu_custom_call.1} parent=1 // pred_check
      _
    $region15: #{tpu_custom_call.1} parent=1 // pred_check_branch
      %46 = sbr.rel (0) target = $region17
    $region16: #{tpu_custom_call.1} parent=1 // pred_region
      %s48 = ssub.s32 8192, 8192
      %49 = vsyncadd [#allocation7], %s48
      %s50 = sshll.u32 [#allocation8], 4
      %s51 = int_to_ptr.vmem [resolvable:$true] %s50
      %56 = dma.hbm_to_vmem [thread:$0]  %s3, 8192, %s51, [#allocation7], 256, 256, 16
    $region17: #{tpu_custom_call.1} parent=1 // pred_fallthru
      _
    // Predicated region
    $region18: #{tpu_custom_call.1} parent=1 // pred_check
      _
    $region19: #{tpu_custom_call.1} parent=1 // pred_check_branch
      %58 = sbr.rel (0) target = $region21
    $region20: #{tpu_custom_call.1} parent=1 // pred_region
      %s60 = ssub.s32 64, 64
      %61 = vsyncadd [#allocation10], %s60
      %s63 = sshll.u32 [#allocation9], 4
      %s64 = int_to_ptr.vmem [resolvable:$true] %s63
      %66 = dma.hbm_to_vmem [thread:$0]  %s4, 64, %s64, [#allocation10]
    $region21: #{tpu_custom_call.1} parent=1 // pred_fallthru
      _
    // Predicated region
    $region22: #{tpu_custom_call.1} parent=1 // pred_check
      _
    $region23: #{tpu_custom_call.1} parent=1 // pred_check_branch
      %68 = sbr.rel (0) target = $region25
    $region24: #{tpu_custom_call.1} parent=1 // pred_region
      %s70 = ssub.s32 32768, 32768
      %71 = vsyncadd [#allocation10], %s70
      %s72 = sshll.u32 [#allocation11], 4
      %s73 = int_to_ptr.vmem [resolvable:$true] %s72
      %78 = dma.hbm_to_vmem [thread:$0]  %s5, 32768, %s73, [#allocation10], 512, 512, 32
    $region25: #{tpu_custom_call.1} parent=1 // pred_fallthru
      _
    // Predicated region
    $region26: #{tpu_custom_call.1} parent=1 // pred_check
      _
    $region27: #{tpu_custom_call.1} parent=1 // pred_check_branch
      %80 = sbr.rel (0) target = $region29
    $region28: #{tpu_custom_call.1} parent=1 // pred_region
      _
    $region29: #{tpu_custom_call.1} parent=1 // pred_fallthru
      _
    // Predicated region
    $region30: #{tpu_custom_call.1} parent=1 // pred_check
      _
    $region31: #{tpu_custom_call.1} parent=1 // pred_check_branch
      %82 = sbr.rel (0) target = $region33
    $region32: #{tpu_custom_call.1} parent=1 // pred_region
      %s84 = ssub.s32 8192, 8192
      %85 = vsyncadd [#allocation13], %s84
      %s86 = sshll.u32 [#allocation12], 4
      %s87 = int_to_ptr.vmem [resolvable:$true] %s86
      %92 = dma.hbm_to_vmem [thread:$0]  %s7, 8192, %s87, [#allocation13], 64, 64, 4
    $region33: #{tpu_custom_call.1} parent=1 // pred_fallthru
      _
    // Predicated region
    $region34: #{tpu_custom_call.1} parent=1 // pred_check
      _
    $region35: #{tpu_custom_call.1} parent=1 // pred_check_branch
      %94 = sbr.rel (0) target = $region37
    $region36: #{tpu_custom_call.1} parent=1 // pred_region
      _
    $region37: #{tpu_custom_call.1} parent=1 // pred_fallthru
      _
    // Predicated region
    $region38: #{tpu_custom_call.1} parent=1 // pred_check
      _
    $region39: #{tpu_custom_call.1} parent=1 // pred_check_branch
      %96 = sbr.rel (0) target = $region41
    $region40: #{tpu_custom_call.1} parent=1 // pred_region
      %97 = dma.done [#allocation4], 128
    $region41: #{tpu_custom_call.1} parent=1 // pred_fallthru
      _
    // Predicated region
    $region42: #{tpu_custom_call.1} parent=1 // pred_check
      _
    $region43: #{tpu_custom_call.1} parent=1 // pred_check_branch
      %99 = sbr.rel (0) target = $region45
    $region44: #{tpu_custom_call.1} parent=1 // pred_region
      %100 = dma.done [#allocation7], 1024
    $region45: #{tpu_custom_call.1} parent=1 // pred_fallthru
      _
    // Predicated region
    $region46: #{tpu_custom_call.1} parent=1 // pred_check
      _
    $region47: #{tpu_custom_call.1} parent=1 // pred_check_branch
      %102 = sbr.rel (0) target = $region49
    $region48: #{tpu_custom_call.1} parent=1 // pred_region
      %103 = dma.done [#allocation7], 8192
    $region49: #{tpu_custom_call.1} parent=1 // pred_fallthru
      _
    // Predicated region
    $region50: #{tpu_custom_call.1} parent=1 // pred_check
      _
    $region51: #{tpu_custom_call.1} parent=1 // pred_check_branch
      %105 = sbr.rel (0) target = $region53
    $region52: #{tpu_custom_call.1} parent=1 // pred_region
      %106 = dma.done [#allocation10], 64
    $region53: #{tpu_custom_call.1} parent=1 // pred_fallthru
      _
    // Predicated region
    $region54: #{tpu_custom_call.1} parent=1 // pred_check
      _
    $region55: #{tpu_custom_call.1} parent=1 // pred_check_branch
      %108 = sbr.rel (0) target = $region57
    $region56: #{tpu_custom_call.1} parent=1 // pred_region
      %109 = dma.done [#allocation10], 32768
    $region57: #{tpu_custom_call.1} parent=1 // pred_fallthru
      _
    // Predicated region
    $region58: #{tpu_custom_call.1} parent=1 // pred_check
      _
    $region59: #{tpu_custom_call.1} parent=1 // pred_check_branch
      %111 = sbr.rel (0) target = $region61
    $region60: #{tpu_custom_call.1} parent=1 // pred_region
      %112 = dma.done [#allocation13], 8192
    $region61: #{tpu_custom_call.1} parent=1 // pred_fallthru
      _
    %p115 = scmp.eq.s32.totalorder 0, 0
    // Predicated region
    $region62: #{tpu_custom_call.1} parent=1 // pred_check
      %p116 = pneg %p115
    $region63: #{tpu_custom_call.1} parent=1 // pred_check_branch
      %118 = sbr.rel (%p116) target = $region65
    $region64: #{tpu_custom_call.1} parent=1 // pred_region
      %v119 = vld [vmem:[#allocation3] sm:$0xf]
      %v120 = vld [vmem:[#allocation3 + $0x4] sm:$0xf]
      %v121 = vld [vmem:[#allocation6] sm:$0xff]
      %v122 = vld [vmem:[#allocation6 + $0x8] sm:$0xff]
      %v123 = vld [vmem:[#allocation6 + $0x10] sm:$0xff]
      %v124 = vld [vmem:[#allocation6 + $0x18] sm:$0xff]
      %v125 = vld [vmem:[#allocation6 + $0x20] sm:$0xff]
      %v126 = vld [vmem:[#allocation6 + $0x28] sm:$0xff]
      %v127 = vld [vmem:[#allocation6 + $0x30] sm:$0xff]
      %v128 = vld [vmem:[#allocation6 + $0x38] sm:$0xff]
      %v131 = vunpack.c.l.b16 %v119
      %v132 = vunpack.c.l.b16 %v120
      %v133 = vpack.c.b16 %v132, %v131
      %v142 = vunpack.c.l.b16 %v121
      %v143 = vunpack.c.h.b16 %v121
      %v144 = vunpack.c.l.b16 %v122
      %v145 = vunpack.c.h.b16 %v122
      %v146 = vunpack.c.l.b16 %v123
      %v147 = vunpack.c.h.b16 %v123
      %v148 = vunpack.c.l.b16 %v124
      %v149 = vunpack.c.h.b16 %v124
      %v150 = vunpack.c.l.b16 %v125
      %v151 = vunpack.c.h.b16 %v125
      %v152 = vunpack.c.l.b16 %v126
      %v153 = vunpack.c.h.b16 %v126
      %v154 = vunpack.c.l.b16 %v127
      %v155 = vunpack.c.h.b16 %v127
      %v156 = vunpack.c.l.b16 %v128
      %v157 = vunpack.c.h.b16 %v128
      %v158 = vpack.c.b16 %v144, %v142
      %v159 = vpack.c.b16 %v145, %v143
      %v160 = vpack.c.b16 %v148, %v146
      %v161 = vpack.c.b16 %v149, %v147
      %v162 = vpack.c.b16 %v152, %v150
      %v163 = vpack.c.b16 %v153, %v151
      %v164 = vpack.c.b16 %v156, %v154
      %v165 = vpack.c.b16 %v157, %v155
      %vm174 = vcmask 523264
      %v176 = vsel %vm174, %v133, 0
      %178 = vmatprep.subr.bf16.mxu0 0
      %179 = vmatpush1.bf16.msra.mxu0 0
      %180 = vmatprep.subr.bf16.mxu0 0
      %181 = vmatpush1.bf16.msra.mxu0 0
      %182 = vmatprep.subr.bf16.mxu0 0
      %183 = vmatpush1.bf16.msra.mxu0 0
      %184 = vmatprep.subr.bf16.mxu0 0
      %185 = vmatpush1.bf16.msra.mxu0 0
      %186 = vmatprep.subr.bf16.mxu0 %v165
      %187 = vmatpush1.bf16.msra.mxu0 %v164
      %188 = vmatprep.subr.bf16.mxu0 %v163
      %189 = vmatpush1.bf16.msra.mxu0 %v162
      %190 = vmatprep.subr.bf16.mxu0 %v161
      %191 = vmatpush1.bf16.msra.mxu0 %v160
      %192 = vmatprep.subr.bf16.mxu0 %v159
      %193 = vmatpush1.bf16.msra.mxu0 %v158
      %194 = vmatprep.subr.bf16.mxu0 0
      %195 = vmatpush2.bf16.msra.mxu0 0
      %196 = vmatprep.subr.bf16.mxu0 0
      %197 = vmatpush2.bf16.msra.mxu0 0
      %198 = vmatprep.subr.bf16.mxu0 0
      %199 = vmatpush2.bf16.msra.mxu0 0
      %200 = vmatprep.subr.bf16.mxu0 0
      %201 = vmatpush2.bf16.msra.mxu0 0
      %202 = vmatprep.subr.bf16.mxu0 0
      %203 = vmatpush2.bf16.msra.mxu0 0
      %204 = vmatprep.subr.bf16.mxu0 0
      %205 = vmatpush2.bf16.msra.mxu0 0
      %206 = vmatprep.subr.bf16.mxu0 0
      %207 = vmatpush2.bf16.msra.mxu0 0
      %208 = vmatprep.subr.bf16.mxu0 0
      %209 = vmatpush2.bf16.msra.mxu0 0
      %210 = vmatprep.mubr.bf16.mxu0 0
      %211 = vmatmul.mubr.bf16.gmra.mxu0 %v176
      %v212 = vpop.f32.mrf.mxu0
      %v213 = vadd.f32 0.0, %v212
      %v214 = vpop.f32.mrf.mxu0
      %v215 = vadd.f32 0.0, %v214
      %v216 = vpop.f32.mrf.mxu0
      %v217 = vadd.f32 0.0, %v216
      %v218 = vpop.f32.mrf.mxu0
      %v219 = vadd.f32 0.0, %v218
      %220 = vdwg.mxu0
      %v221 = vpack.c.bf16 %v217, %v213
      %v222 = vpack.c.bf16 %v219, %v215
      %v223 = vld [vmem:[%s2] sm:$0x3]
      %v226 = vunpack.c.l.s4 1966171168
      %v227 = vunpack.c.0.s8 %v226
      %v228 = vlaneseq
      %v229 = vshrl.u32 %v228, 7
      %v230 = vsub.s32 %v227, %v229
      %v231 = vrot.slane %v223, %v230
      %v232 = vcombine.high %v231, %v231
      %v234 = vunpack.c.l.s4 1966171168
      %v235 = vunpack.c.0.s8 %v234
      %v236 = vlaneseq
      %v237 = vshrl.u32 %v236, 7
      %v238 = vsub.s32 %v235, %v237
      %v239 = vrot.slane %v231, %v238
      %v241 = vunpack.c.l.s4 1966171168
      %v242 = vunpack.c.0.s8 %v241
      %v243 = vlaneseq
      %v244 = vshrl.u32 %v243, 7
      %v245 = vsub.s32 %v242, %v244
      %v246 = vrot.slane %v232, %v245
      %v248 = vpack.i.b16 %v239, %v239
      %v250 = vlaneseq
      %v251 = vshrl.u32 %v250, 7
      %v252 = vsub.s32 0, %v251
      %v253 = vrot.slane %v248, %v252
      %v255 = vpack.i.b16 %v246, %v246
      %v257 = vlaneseq
      %v258 = vshrl.u32 %v257, 7
      %v259 = vsub.s32 0, %v258
      %v260 = vrot.slane %v255, %v259
      %v261 = vadd.bf16 %v221, %v253
      %v262 = vadd.bf16 %v222, %v260
      %v263 = vmul.bf16 %v261, 1045249613
      %v264 = vmul.bf16 %v262, 1045249613
      %v265 = vmax.bf16 %v261, %v263
      %v266 = vmax.bf16 %v262, %v264
      %v267 = vld [vmem:[#allocation8] sm:$0xff]
      %v268 = vld [vmem:[#allocation8 + $0x8] sm:$0xff]
      %v269 = vld [vmem:[#allocation8 + $0x10] sm:$0xff]
      %v270 = vld [vmem:[#allocation8 + $0x18] sm:$0xff]
      %v271 = vld [vmem:[#allocation8 + $0x20] sm:$0xff]
      %v272 = vld [vmem:[#allocation8 + $0x28] sm:$0xff]
      %v273 = vld [vmem:[#allocation8 + $0x30] sm:$0xff]
      %v274 = vld [vmem:[#allocation8 + $0x38] sm:$0xff]
      %v275 = vld [vmem:[#allocation8 + $0x40] sm:$0xff]
      %v276 = vld [vmem:[#allocation8 + $0x48] sm:$0xff]
      %v277 = vld [vmem:[#allocation8 + $0x50] sm:$0xff]
      %v278 = vld [vmem:[#allocation8 + $0x58] sm:$0xff]
      %v279 = vld [vmem:[#allocation8 + $0x60] sm:$0xff]
      %v280 = vld [vmem:[#allocation8 + $0x68] sm:$0xff]
      %v281 = vld [vmem:[#allocation8 + $0x70] sm:$0xff]
      %v282 = vld [vmem:[#allocation8 + $0x78] sm:$0xff]
      %v283 = vld [vmem:[#allocation8 + $0x80] sm:$0xff]
      %v284 = vld [vmem:[#allocation8 + $0x88] sm:$0xff]
      %v285 = vld [vmem:[#allocation8 + $0x90] sm:$0xff]
      %v286 = vld [vmem:[#allocation8 + $0x98] sm:$0xff]
      %v287 = vld [vmem:[#allocation8 + $0xa0] sm:$0xff]
      %v288 = vld [vmem:[#allocation8 + $0xa8] sm:$0xff]
      %v289 = vld [vmem:[#allocation8 + $0xb0] sm:$0xff]
      %v290 = vld [vmem:[#allocation8 + $0xb8] sm:$0xff]
      %v291 = vld [vmem:[#allocation8 + $0xc0] sm:$0xff]
      %v292 = vld [vmem:[#allocation8 + $0xc8] sm:$0xff]
      %v293 = vld [vmem:[#allocation8 + $0xd0] sm:$0xff]
      %v294 = vld [vmem:[#allocation8 + $0xd8] sm:$0xff]
      %v295 = vld [vmem:[#allocation8 + $0xe0] sm:$0xff]
      %v296 = vld [vmem:[#allocation8 + $0xe8] sm:$0xff]
      %v297 = vld [vmem:[#allocation8 + $0xf0] sm:$0xff]
      %v298 = vld [vmem:[#allocation8 + $0xf8] sm:$0xff]
      %v299 = vld [vmem:[#allocation8 + $0x100] sm:$0xff]
      %v300 = vld [vmem:[#allocation8 + $0x108] sm:$0xff]
      %v301 = vld [vmem:[#allocation8 + $0x110] sm:$0xff]
      %v302 = vld [vmem:[#allocation8 + $0x118] sm:$0xff]
      %v303 = vld [vmem:[#allocation8 + $0x120] sm:$0xff]
      %v304 = vld [vmem:[#allocation8 + $0x128] sm:$0xff]
      %v305 = vld [vmem:[#allocation8 + $0x130] sm:$0xff]
      %v306 = vld [vmem:[#allocation8 + $0x138] sm:$0xff]
      %v307 = vld [vmem:[#allocation8 + $0x140] sm:$0xff]
      %v308 = vld [vmem:[#allocation8 + $0x148] sm:$0xff]
      %v309 = vld [vmem:[#allocation8 + $0x150] sm:$0xff]
      %v310 = vld [vmem:[#allocation8 + $0x158] sm:$0xff]
      %v311 = vld [vmem:[#allocation8 + $0x160] sm:$0xff]
      %v312 = vld [vmem:[#allocation8 + $0x168] sm:$0xff]
      %v313 = vld [vmem:[#allocation8 + $0x170] sm:$0xff]
      %v314 = vld [vmem:[#allocation8 + $0x178] sm:$0xff]
      %v315 = vld [vmem:[#allocation8 + $0x180] sm:$0xff]
      %v316 = vld [vmem:[#allocation8 + $0x188] sm:$0xff]
      %v317 = vld [vmem:[#allocation8 + $0x190] sm:$0xff]
      %v318 = vld [vmem:[#allocation8 + $0x198] sm:$0xff]
      %v319 = vld [vmem:[#allocation8 + $0x1a0] sm:$0xff]
      %v320 = vld [vmem:[#allocation8 + $0x1a8] sm:$0xff]
      %v321 = vld [vmem:[#allocation8 + $0x1b0] sm:$0xff]
      %v322 = vld [vmem:[#allocation8 + $0x1b8] sm:$0xff]
      %v323 = vld [vmem:[#allocation8 + $0x1c0] sm:$0xff]
      %v324 = vld [vmem:[#allocation8 + $0x1c8] sm:$0xff]
      %v325 = vld [vmem:[#allocation8 + $0x1d0] sm:$0xff]
      %v326 = vld [vmem:[#allocation8 + $0x1d8] sm:$0xff]
      %v327 = vld [vmem:[#allocation8 + $0x1e0] sm:$0xff]
      %v328 = vld [vmem:[#allocation8 + $0x1e8] sm:$0xff]
      %v329 = vld [vmem:[#allocation8 + $0x1f0] sm:$0xff]
      %v330 = vld [vmem:[#allocation8 + $0x1f8] sm:$0xff]
      %v395 = vunpack.c.l.b16 %v267
      %v396 = vunpack.c.h.b16 %v267
      %v397 = vunpack.c.l.b16 %v268
      %v398 = vunpack.c.h.b16 %v268
      %v399 = vunpack.c.l.b16 %v269
      %v400 = vunpack.c.h.b16 %v269
      %v401 = vunpack.c.l.b16 %v270
      %v402 = vunpack.c.h.b16 %v270
      %v403 = vunpack.c.l.b16 %v271
      %v404 = vunpack.c.h.b16 %v271
      %v405 = vunpack.c.l.b16 %v272
      %v406 = vunpack.c.h.b16 %v272
      %v407 = vunpack.c.l.b16 %v273
      %v408 = vunpack.c.h.b16 %v273
      %v409 = vunpack.c.l.b16 %v274
      %v410 = vunpack.c.h.b16 %v274
      %v411 = vunpack.c.l.b16 %v275
      %v412 = vunpack.c.h.b16 %v275
      %v413 = vunpack.c.l.b16 %v276
      %v414 = vunpack.c.h.b16 %v276
      %v415 = vunpack.c.l.b16 %v277
      %v416 = vunpack.c.h.b16 %v277
      %v417 = vunpack.c.l.b16 %v278
      %v418 = vunpack.c.h.b16 %v278
      %v419 = vunpack.c.l.b16 %v279
      %v420 = vunpack.c.h.b16 %v279
      %v421 = vunpack.c.l.b16 %v280
      %v422 = vunpack.c.h.b16 %v280
      %v423 = vunpack.c.l.b16 %v281
      %v424 = vunpack.c.h.b16 %v281
      %v425 = vunpack.c.l.b16 %v282
      %v426 = vunpack.c.h.b16 %v282
      %v427 = vunpack.c.l.b16 %v283
      %v428 = vunpack.c.h.b16 %v283
      %v429 = vunpack.c.l.b16 %v284
      %v430 = vunpack.c.h.b16 %v284
      %v431 = vunpack.c.l.b16 %v285
      %v432 = vunpack.c.h.b16 %v285
      %v433 = vunpack.c.l.b16 %v286
      %v434 = vunpack.c.h.b16 %v286
      %v435 = vunpack.c.l.b16 %v287
      %v436 = vunpack.c.h.b16 %v287
      %v437 = vunpack.c.l.b16 %v288
      %v438 = vunpack.c.h.b16 %v288
      %v439 = vunpack.c.l.b16 %v289
      %v440 = vunpack.c.h.b16 %v289
      %v441 = vunpack.c.l.b16 %v290
      %v442 = vunpack.c.h.b16 %v290
      %v443 = vunpack.c.l.b16 %v291
      %v444 = vunpack.c.h.b16 %v291
      %v445 = vunpack.c.l.b16 %v292
      %v446 = vunpack.c.h.b16 %v292
      %v447 = vunpack.c.l.b16 %v293
      %v448 = vunpack.c.h.b16 %v293
      %v449 = vunpack.c.l.b16 %v294
      %v450 = vunpack.c.h.b16 %v294
      %v451 = vunpack.c.l.b16 %v295
      %v452 = vunpack.c.h.b16 %v295
      %v453 = vunpack.c.l.b16 %v296
      %v454 = vunpack.c.h.b16 %v296
      %v455 = vunpack.c.l.b16 %v297
      %v456 = vunpack.c.h.b16 %v297
      %v457 = vunpack.c.l.b16 %v298
      %v458 = vunpack.c.h.b16 %v298
      %v459 = vunpack.c.l.b16 %v299
      %v460 = vunpack.c.h.b16 %v299
      %v461 = vunpack.c.l.b16 %v300
      %v462 = vunpack.c.h.b16 %v300
      %v463 = vunpack.c.l.b16 %v301
      %v464 = vunpack.c.h.b16 %v301
      %v465 = vunpack.c.l.b16 %v302
      %v466 = vunpack.c.h.b16 %v302
      %v467 = vunpack.c.l.b16 %v303
      %v468 = vunpack.c.h.b16 %v303
      %v469 = vunpack.c.l.b16 %v304
      %v470 = vunpack.c.h.b16 %v304
      %v471 = vunpack.c.l.b16 %v305
      %v472 = vunpack.c.h.b16 %v305
      %v473 = vunpack.c.l.b16 %v306
      %v474 = vunpack.c.h.b16 %v306
      %v475 = vunpack.c.l.b16 %v307
      %v476 = vunpack.c.h.b16 %v307
      %v477 = vunpack.c.l.b16 %v308
      %v478 = vunpack.c.h.b16 %v308
      %v479 = vunpack.c.l.b16 %v309
      %v480 = vunpack.c.h.b16 %v309
      %v481 = vunpack.c.l.b16 %v310
      %v482 = vunpack.c.h.b16 %v310
      %v483 = vunpack.c.l.b16 %v311
      %v484 = vunpack.c.h.b16 %v311
      %v485 = vunpack.c.l.b16 %v312
      %v486 = vunpack.c.h.b16 %v312
      %v487 = vunpack.c.l.b16 %v313
      %v488 = vunpack.c.h.b16 %v313
      %v489 = vunpack.c.l.b16 %v314
      %v490 = vunpack.c.h.b16 %v314
      %v491 = vunpack.c.l.b16 %v315
      %v492 = vunpack.c.h.b16 %v315
      %v493 = vunpack.c.l.b16 %v316
      %v494 = vunpack.c.h.b16 %v316
      %v495 = vunpack.c.l.b16 %v317
      %v496 = vunpack.c.h.b16 %v317
      %v497 = vunpack.c.l.b16 %v318
      %v498 = vunpack.c.h.b16 %v318
      %v499 = vunpack.c.l.b16 %v319
      %v500 = vunpack.c.h.b16 %v319
      %v501 = vunpack.c.l.b16 %v320
      %v502 = vunpack.c.h.b16 %v320
      %v503 = vunpack.c.l.b16 %v321
      %v504 = vunpack.c.h.b16 %v321
      %v505 = vunpack.c.l.b16 %v322
      %v506 = vunpack.c.h.b16 %v322
      %v507 = vunpack.c.l.b16 %v323
      %v508 = vunpack.c.h.b16 %v323
      %v509 = vunpack.c.l.b16 %v324
      %v510 = vunpack.c.h.b16 %v324
      %v511 = vunpack.c.l.b16 %v325
      %v512 = vunpack.c.h.b16 %v325
      %v513 = vunpack.c.l.b16 %v326
      %v514 = vunpack.c.h.b16 %v326
      %v515 = vunpack.c.l.b16 %v327
      %v516 = vunpack.c.h.b16 %v327
      %v517 = vunpack.c.l.b16 %v328
      %v518 = vunpack.c.h.b16 %v328
      %v519 = vunpack.c.l.b16 %v329
      %v520 = vunpack.c.h.b16 %v329
      %v521 = vunpack.c.l.b16 %v330
      %v522 = vunpack.c.h.b16 %v330
      %v523 = vpack.c.b16 %v399, %v395
      %v524 = vpack.c.b16 %v400, %v396
      %v525 = vpack.c.b16 %v401, %v397
      %v526 = vpack.c.b16 %v402, %v398
      %v527 = vpack.c.b16 %v407, %v403
      %v528 = vpack.c.b16 %v408, %v404
      %v529 = vpack.c.b16 %v409, %v405
      %v530 = vpack.c.b16 %v410, %v406
      %v531 = vpack.c.b16 %v415, %v411
      %v532 = vpack.c.b16 %v416, %v412
      %v533 = vpack.c.b16 %v417, %v413
      %v534 = vpack.c.b16 %v418, %v414
      %v535 = vpack.c.b16 %v423, %v419
      %v536 = vpack.c.b16 %v424, %v420
      %v537 = vpack.c.b16 %v425, %v421
      %v538 = vpack.c.b16 %v426, %v422
      %v539 = vpack.c.b16 %v431, %v427
      %v540 = vpack.c.b16 %v432, %v428
      %v541 = vpack.c.b16 %v433, %v429
      %v542 = vpack.c.b16 %v434, %v430
      %v543 = vpack.c.b16 %v439, %v435
      %v544 = vpack.c.b16 %v440, %v436
      %v545 = vpack.c.b16 %v441, %v437
      %v546 = vpack.c.b16 %v442, %v438
      %v547 = vpack.c.b16 %v447, %v443
      %v548 = vpack.c.b16 %v448, %v444
      %v549 = vpack.c.b16 %v449, %v445
      %v550 = vpack.c.b16 %v450, %v446
      %v551 = vpack.c.b16 %v455, %v451
      %v552 = vpack.c.b16 %v456, %v452
      %v553 = vpack.c.b16 %v457, %v453
      %v554 = vpack.c.b16 %v458, %v454
      %v555 = vpack.c.b16 %v463, %v459
      %v556 = vpack.c.b16 %v464, %v460
      %v557 = vpack.c.b16 %v465, %v461
      %v558 = vpack.c.b16 %v466, %v462
      %v559 = vpack.c.b16 %v471, %v467
      %v560 = vpack.c.b16 %v472, %v468
      %v561 = vpack.c.b16 %v473, %v469
      %v562 = vpack.c.b16 %v474, %v470
      %v563 = vpack.c.b16 %v479, %v475
      %v564 = vpack.c.b16 %v480, %v476
      %v565 = vpack.c.b16 %v481, %v477
      %v566 = vpack.c.b16 %v482, %v478
      %v567 = vpack.c.b16 %v487, %v483
      %v568 = vpack.c.b16 %v488, %v484
      %v569 = vpack.c.b16 %v489, %v485
      %v570 = vpack.c.b16 %v490, %v486
      %v571 = vpack.c.b16 %v495, %v491
      %v572 = vpack.c.b16 %v496, %v492
      %v573 = vpack.c.b16 %v497, %v493
      %v574 = vpack.c.b16 %v498, %v494
      %v575 = vpack.c.b16 %v503, %v499
      %v576 = vpack.c.b16 %v504, %v500
      %v577 = vpack.c.b16 %v505, %v501
      %v578 = vpack.c.b16 %v506, %v502
      %v579 = vpack.c.b16 %v511, %v507
      %v580 = vpack.c.b16 %v512, %v508
      %v581 = vpack.c.b16 %v513, %v509
      %v582 = vpack.c.b16 %v514, %v510
      %v583 = vpack.c.b16 %v519, %v515
      %v584 = vpack.c.b16 %v520, %v516
      %v585 = vpack.c.b16 %v521, %v517
      %v586 = vpack.c.b16 %v522, %v518
      %651 = vmatprep.subr.bf16.mxu0 %v552
      %652 = vmatpush1.bf16.msra.mxu0 %v551
      %653 = vmatprep.subr.bf16.mxu0 %v548
      %654 = vmatpush1.bf16.msra.mxu0 %v547
      %655 = vmatprep.subr.bf16.mxu0 %v544
      %656 = vmatpush1.bf16.msra.mxu0 %v543
      %657 = vmatprep.subr.bf16.mxu0 %v540
      %658 = vmatpush1.bf16.msra.mxu0 %v539
      %659 = vmatprep.subr.bf16.mxu0 %v536
      %660 = vmatpush1.bf16.msra.mxu0 %v535
      %661 = vmatprep.subr.bf16.mxu0 %v532
      %662 = vmatpush1.bf16.msra.mxu0 %v531
      %663 = vmatprep.subr.bf16.mxu0 %v528
      %664 = vmatpush1.bf16.msra.mxu0 %v527
      %665 = vmatprep.subr.bf16.mxu0 %v524
      %666 = vmatpush1.bf16.msra.mxu0 %v523
      %667 = vmatprep.subr.bf16.mxu0 %v584
      %668 = vmatpush2.bf16.msra.mxu0 %v583
      %669 = vmatprep.subr.bf16.mxu0 %v580
      %670 = vmatpush2.bf16.msra.mxu0 %v579
      %671 = vmatprep.subr.bf16.mxu0 %v576
      %672 = vmatpush2.bf16.msra.mxu0 %v575
      %673 = vmatprep.subr.bf16.mxu0 %v572
      %674 = vmatpush2.bf16.msra.mxu0 %v571
      %675 = vmatprep.subr.bf16.mxu0 %v568
      %676 = vmatpush2.bf16.msra.mxu0 %v567
      %677 = vmatprep.subr.bf16.mxu0 %v564
      %678 = vmatpush2.bf16.msra.mxu0 %v563
      %679 = vmatprep.subr.bf16.mxu0 %v560
      %680 = vmatpush2.bf16.msra.mxu0 %v559
      %681 = vmatprep.subr.bf16.mxu0 %v556
      %682 = vmatpush2.bf16.msra.mxu0 %v555
      %683 = vmatprep.mubr.bf16.mxu0 %v266
      %684 = vmatmul.mubr.bf16.gmra.mxu0 %v265
      %v685 = vpop.f32.mrf.mxu0
      %v686 = vadd.f32 0.0, %v685
      %v687 = vpop.f32.mrf.mxu0
      %v688 = vadd.f32 0.0, %v687
      %v689 = vpop.f32.mrf.mxu0
      %v690 = vadd.f32 0.0, %v689
      %v691 = vpop.f32.mrf.mxu0
      %v692 = vadd.f32 0.0, %v691
      %693 = vdwg.mxu0
      %694 = vmatprep.subr.bf16.mxu0 %v554
      %695 = vmatpush1.bf16.msra.mxu0 %v553
      %696 = vmatprep.subr.bf16.mxu0 %v550
      %697 = vmatpush1.bf16.msra.mxu0 %v549
      %698 = vmatprep.subr.bf16.mxu0 %v546
      %699 = vmatpush1.bf16.msra.mxu0 %v545
      %700 = vmatprep.subr.bf16.mxu0 %v542
      %701 = vmatpush1.bf16.msra.mxu0 %v541
      %702 = vmatprep.subr.bf16.mxu0 %v538
      %703 = vmatpush1.bf16.msra.mxu0 %v537
      %704 = vmatprep.subr.bf16.mxu0 %v534
      %705 = vmatpush1.bf16.msra.mxu0 %v533
      %706 = vmatprep.subr.bf16.mxu0 %v530
      %707 = vmatpush1.bf16.msra.mxu0 %v529
      %708 = vmatprep.subr.bf16.mxu0 %v526
      %709 = vmatpush1.bf16.msra.mxu0 %v525
      %710 = vmatprep.subr.bf16.mxu0 %v586
      %711 = vmatpush2.bf16.msra.mxu0 %v585
      %712 = vmatprep.subr.bf16.mxu0 %v582
      %713 = vmatpush2.bf16.msra.mxu0 %v581
      %714 = vmatprep.subr.bf16.mxu0 %v578
      %715 = vmatpush2.bf16.msra.mxu0 %v577
      %716 = vmatprep.subr.bf16.mxu0 %v574
      %717 = vmatpush2.bf16.msra.mxu0 %v573
      %718 = vmatprep.subr.bf16.mxu0 %v570
      %719 = vmatpush2.bf16.msra.mxu0 %v569
      %720 = vmatprep.subr.bf16.mxu0 %v566
      %721 = vmatpush2.bf16.msra.mxu0 %v565
      %722 = vmatprep.subr.bf16.mxu0 %v562
      %723 = vmatpush2.bf16.msra.mxu0 %v561
      %724 = vmatprep.subr.bf16.mxu0 %v558
      %725 = vmatpush2.bf16.msra.mxu0 %v557
      %726 = vmatprep.mubr.bf16.mxu0 %v266
      %727 = vmatmul.mubr.bf16.gmra.mxu0 %v265
      %v728 = vpop.f32.mrf.mxu0
      %v729 = vadd.f32 0.0, %v728
      %v730 = vpop.f32.mrf.mxu0
      %v731 = vadd.f32 0.0, %v730
      %v732 = vpop.f32.mrf.mxu0
      %v733 = vadd.f32 0.0, %v732
      %v734 = vpop.f32.mrf.mxu0
      %v735 = vadd.f32 0.0, %v734
      %736 = vdwg.mxu0
      %v737 = vpack.c.bf16 %v690, %v686
      %v738 = vpack.c.bf16 %v692, %v688
      %v739 = vpack.c.bf16 %v733, %v729
      %v740 = vpack.c.bf16 %v735, %v731
      %v741 = vld [vmem:[#allocation9] sm:$0xf]
      %v744 = vunpack.c.l.s4 1966171168
      %v745 = vunpack.c.0.s8 %v744
      %v746 = vlaneseq
      %v747 = vshrl.u32 %v746, 7
      %v748 = vsub.s32 %v745, %v747
      %v749 = vrot.slane %v741, %v748
      %v750 = vcombine.high %v749, %v749
      %v752 = vunpack.c.l.s4 1966171168
      %v753 = vunpack.c.0.s8 %v752
      %v754 = vlaneseq
      %v755 = vshrl.u32 %v754, 7
      %v756 = vsub.s32 %v753, %v755
      %v757 = vrot.slane %v749, %v756
      %v759 = vunpack.c.l.s4 1966171168
      %v760 = vunpack.c.0.s8 %v759
      %v761 = vlaneseq
      %v762 = vshrl.u32 %v761, 7
      %v763 = vsub.s32 %v760, %v762
      %v764 = vrot.slane %v750, %v763
      %v765 = vcombine.high %v757, %v757
      %v766 = vcombine.high %v764, %v764
      %v768 = vpack.i.b16 %v757, %v757
      %v770 = vlaneseq
      %v771 = vshrl.u32 %v770, 7
      %v772 = vsub.s32 0, %v771
      %v773 = vrot.slane %v768, %v772
      %v775 = vpack.i.b16 %v764, %v764
      %v777 = vlaneseq
      %v778 = vshrl.u32 %v777, 7
      %v779 = vsub.s32 0, %v778
      %v780 = vrot.slane %v775, %v779
      %v782 = vpack.i.b16 %v765, %v765
      %v784 = vlaneseq
      %v785 = vshrl.u32 %v784, 7
      %v786 = vsub.s32 0, %v785
      %v787 = vrot.slane %v782, %v786
      %v789 = vpack.i.b16 %v766, %v766
      %v791 = vlaneseq
      %v792 = vshrl.u32 %v791, 7
      %v793 = vsub.s32 0, %v792
      %v794 = vrot.slane %v789, %v793
      %v795 = vadd.bf16 %v737, %v773
      %v796 = vadd.bf16 %v738, %v780
      %v797 = vadd.bf16 %v739, %v787
      %v798 = vadd.bf16 %v740, %v794
      %v799 = vmul.bf16 %v795, 1045249613
      %v800 = vmul.bf16 %v796, 1045249613
      %v801 = vmul.bf16 %v797, 1045249613
      %v802 = vmul.bf16 %v798, 1045249613
      %v803 = vmax.bf16 %v795, %v799
      %v804 = vmax.bf16 %v796, %v800
      %v805 = vmax.bf16 %v797, %v801
      %v806 = vmax.bf16 %v798, %v802
      %v807 = vld [vmem:[#allocation11] sm:$0xff]
      %v808 = vld [vmem:[#allocation11 + $0x8] sm:$0xff]
      %v809 = vld [vmem:[#allocation11 + $0x10] sm:$0xff]
      %v810 = vld [vmem:[#allocation11 + $0x18] sm:$0xff]
      %v811 = vld [vmem:[#allocation11 + $0x20] sm:$0xff]
      %v812 = vld [vmem:[#allocation11 + $0x28] sm:$0xff]
      %v813 = vld [vmem:[#allocation11 + $0x30] sm:$0xff]
      %v814 = vld [vmem:[#allocation11 + $0x38] sm:$0xff]
      %v815 = vld [vmem:[#allocation11 + $0x40] sm:$0xff]
      %v816 = vld [vmem:[#allocation11 + $0x48] sm:$0xff]
      %v817 = vld [vmem:[#allocation11 + $0x50] sm:$0xff]
      %v818 = vld [vmem:[#allocation11 + $0x58] sm:$0xff]
      %v819 = vld [vmem:[#allocation11 + $0x60] sm:$0xff]
      %v820 = vld [vmem:[#allocation11 + $0x68] sm:$0xff]
      %v821 = vld [vmem:[#allocation11 + $0x70] sm:$0xff]
      %v822 = vld [vmem:[#allocation11 + $0x78] sm:$0xff]
      %v823 = vld [vmem:[#allocation11 + $0x80] sm:$0xff]
      %v824 = vld [vmem:[#allocation11 + $0x88] sm:$0xff]
      %v825 = vld [vmem:[#allocation11 + $0x90] sm:$0xff]
      %v826 = vld [vmem:[#allocation11 + $0x98] sm:$0xff]
      %v827 = vld [vmem:[#allocation11 + $0xa0] sm:$0xff]
      %v828 = vld [vmem:[#allocation11 + $0xa8] sm:$0xff]
      %v829 = vld [vmem:[#allocation11 + $0xb0] sm:$0xff]
      %v830 = vld [vmem:[#allocation11 + $0xb8] sm:$0xff]
      %v831 = vld [vmem:[#allocation11 + $0xc0] sm:$0xff]
      %v832 = vld [vmem:[#allocation11 + $0xc8] sm:$0xff]
      %v833 = vld [vmem:[#allocation11 + $0xd0] sm:$0xff]
      %v834 = vld [vmem:[#allocation11 + $0xd8] sm:$0xff]
      %v835 = vld [vmem:[#allocation11 + $0xe0] sm:$0xff]
      %v836 = vld [vmem:[#allocation11 + $0xe8] sm:$0xff]
      %v837 = vld [vmem:[#allocation11 + $0xf0] sm:$0xff]
      %v838 = vld [vmem:[#allocation11 + $0xf8] sm:$0xff]
      %v839 = vld [vmem:[#allocation11 + $0x100] sm:$0xff]
      %v840 = vld [vmem:[#allocation11 + $0x108] sm:$0xff]
      %v841 = vld [vmem:[#allocation11 + $0x110] sm:$0xff]
      %v842 = vld [vmem:[#allocation11 + $0x118] sm:$0xff]
      %v843 = vld [vmem:[#allocation11 + $0x120] sm:$0xff]
      %v844 = vld [vmem:[#allocation11 + $0x128] sm:$0xff]
      %v845 = vld [vmem:[#allocation11 + $0x130] sm:$0xff]
      %v846 = vld [vmem:[#allocation11 + $0x138] sm:$0xff]
      %v847 = vld [vmem:[#allocation11 + $0x140] sm:$0xff]
      %v848 = vld [vmem:[#allocation11 + $0x148] sm:$0xff]
      %v849 = vld [vmem:[#allocation11 + $0x150] sm:$0xff]
      %v850 = vld [vmem:[#allocation11 + $0x158] sm:$0xff]
      %v851 = vld [vmem:[#allocation11 + $0x160] sm:$0xff]
      %v852 = vld [vmem:[#allocation11 + $0x168] sm:$0xff]
      %v853 = vld [vmem:[#allocation11 + $0x170] sm:$0xff]
      %v854 = vld [vmem:[#allocation11 + $0x178] sm:$0xff]
      %v855 = vld [vmem:[#allocation11 + $0x180] sm:$0xff]
      %v856 = vld [vmem:[#allocation11 + $0x188] sm:$0xff]
      %v857 = vld [vmem:[#allocation11 + $0x190] sm:$0xff]
      %v858 = vld [vmem:[#allocation11 + $0x198] sm:$0xff]
      %v859 = vld [vmem:[#allocation11 + $0x1a0] sm:$0xff]
      %v860 = vld [vmem:[#allocation11 + $0x1a8] sm:$0xff]
      %v861 = vld [vmem:[#allocation11 + $0x1b0] sm:$0xff]
      %v862 = vld [vmem:[#allocation11 + $0x1b8] sm:$0xff]
      %v863 = vld [vmem:[#allocation11 + $0x1c0] sm:$0xff]
      %v864 = vld [vmem:[#allocation11 + $0x1c8] sm:$0xff]
      %v865 = vld [vmem:[#allocation11 + $0x1d0] sm:$0xff]
      %v866 = vld [vmem:[#allocation11 + $0x1d8] sm:$0xff]
      %v867 = vld [vmem:[#allocation11 + $0x1e0] sm:$0xff]
      %v868 = vld [vmem:[#allocation11 + $0x1e8] sm:$0xff]
      %v869 = vld [vmem:[#allocation11 + $0x1f0] sm:$0xff]
      %v870 = vld [vmem:[#allocation11 + $0x1f8] sm:$0xff]
      %v871 = vld [vmem:[#allocation11 + $0x200] sm:$0xff]
      %v872 = vld [vmem:[#allocation11 + $0x208] sm:$0xff]
      %v873 = vld [vmem:[#allocation11 + $0x210] sm:$0xff]
      %v874 = vld [vmem:[#allocation11 + $0x218] sm:$0xff]
      %v875 = vld [vmem:[#allocation11 + $0x220] sm:$0xff]
      %v876 = vld [vmem:[#allocation11 + $0x228] sm:$0xff]
      %v877 = vld [vmem:[#allocation11 + $0x230] sm:$0xff]
      %v878 = vld [vmem:[#allocation11 + $0x238] sm:$0xff]
      %v879 = vld [vmem:[#allocation11 + $0x240] sm:$0xff]
      %v880 = vld [vmem:[#allocation11 + $0x248] sm:$0xff]
      %v881 = vld [vmem:[#allocation11 + $0x250] sm:$0xff]
      %v882 = vld [vmem:[#allocation11 + $0x258] sm:$0xff]
      %v883 = vld [vmem:[#allocation11 + $0x260] sm:$0xff]
      %v884 = vld [vmem:[#allocation11 + $0x268] sm:$0xff]
      %v885 = vld [vmem:[#allocation11 + $0x270] sm:$0xff]
      %v886 = vld [vmem:[#allocation11 + $0x278] sm:$0xff]
      %v887 = vld [vmem:[#allocation11 + $0x280] sm:$0xff]
      %v888 = vld [vmem:[#allocation11 + $0x288] sm:$0xff]
      %v889 = vld [vmem:[#allocation11 + $0x290] sm:$0xff]
      %v890 = vld [vmem:[#allocation11 + $0x298] sm:$0xff]
      %v891 = vld [vmem:[#allocation11 + $0x2a0] sm:$0xff]
      %v892 = vld [vmem:[#allocation11 + $0x2a8] sm:$0xff]
      %v893 = vld [vmem:[#allocation11 + $0x2b0] sm:$0xff]
      %v894 = vld [vmem:[#allocation11 + $0x2b8] sm:$0xff]
      %v895 = vld [vmem:[#allocation11 + $0x2c0] sm:$0xff]
      %v896 = vld [vmem:[#allocation11 + $0x2c8] sm:$0xff]
      %v897 = vld [vmem:[#allocation11 + $0x2d0] sm:$0xff]
      %v898 = vld [vmem:[#allocation11 + $0x2d8] sm:$0xff]
      %v899 = vld [vmem:[#allocation11 + $0x2e0] sm:$0xff]
      %v900 = vld [vmem:[#allocation11 + $0x2e8] sm:$0xff]
      %v901 = vld [vmem:[#allocation11 + $0x2f0] sm:$0xff]
      %v902 = vld [vmem:[#allocation11 + $0x2f8] sm:$0xff]
      %v903 = vld [vmem:[#allocation11 + $0x300] sm:$0xff]
      %v904 = vld [vmem:[#allocation11 + $0x308] sm:$0xff]
      %v905 = vld [vmem:[#allocation11 + $0x310] sm:$0xff]
      %v906 = vld [vmem:[#allocation11 + $0x318] sm:$0xff]
      %v907 = vld [vmem:[#allocation11 + $0x320] sm:$0xff]
      %v908 = vld [vmem:[#allocation11 + $0x328] sm:$0xff]
      %v909 = vld [vmem:[#allocation11 + $0x330] sm:$0xff]
      %v910 = vld [vmem:[#allocation11 + $0x338] sm:$0xff]
      %v911 = vld [vmem:[#allocation11 + $0x340] sm:$0xff]
      %v912 = vld [vmem:[#allocation11 + $0x348] sm:$0xff]
      %v913 = vld [vmem:[#allocation11 + $0x350] sm:$0xff]
      %v914 = vld [vmem:[#allocation11 + $0x358] sm:$0xff]
      %v915 = vld [vmem:[#allocation11 + $0x360] sm:$0xff]
      %v916 = vld [vmem:[#allocation11 + $0x368] sm:$0xff]
      %v917 = vld [vmem:[#allocation11 + $0x370] sm:$0xff]
      %v918 = vld [vmem:[#allocation11 + $0x378] sm:$0xff]
      %v919 = vld [vmem:[#allocation11 + $0x380] sm:$0xff]
      %v920 = vld [vmem:[#allocation11 + $0x388] sm:$0xff]
      %v921 = vld [vmem:[#allocation11 + $0x390] sm:$0xff]
      %v922 = vld [vmem:[#allocation11 + $0x398] sm:$0xff]
      %v923 = vld [vmem:[#allocation11 + $0x3a0] sm:$0xff]
      %v924 = vld [vmem:[#allocation11 + $0x3a8] sm:$0xff]
      %v925 = vld [vmem:[#allocation11 + $0x3b0] sm:$0xff]
      %v926 = vld [vmem:[#allocation11 + $0x3b8] sm:$0xff]
      %v927 = vld [vmem:[#allocation11 + $0x3c0] sm:$0xff]
      %v928 = vld [vmem:[#allocation11 + $0x3c8] sm:$0xff]
      %v929 = vld [vmem:[#allocation11 + $0x3d0] sm:$0xff]
      %v930 = vld [vmem:[#allocation11 + $0x3d8] sm:$0xff]
      %v931 = vld [vmem:[#allocation11 + $0x3e0] sm:$0xff]
      %v932 = vld [vmem:[#allocation11 + $0x3e8] sm:$0xff]
      %v933 = vld [vmem:[#allocation11 + $0x3f0] sm:$0xff]
      %v934 = vld [vmem:[#allocation11 + $0x3f8] sm:$0xff]
      %v935 = vld [vmem:[#allocation11 + $0x400] sm:$0xff]
      %v936 = vld [vmem:[#allocation11 + $0x408] sm:$0xff]
      %v937 = vld [vmem:[#allocation11 + $0x410] sm:$0xff]
      %v938 = vld [vmem:[#allocation11 + $0x418] sm:$0xff]
      %v939 = vld [vmem:[#allocation11 + $0x420] sm:$0xff]
      %v940 = vld [vmem:[#allocation11 + $0x428] sm:$0xff]
      %v941 = vld [vmem:[#allocation11 + $0x430] sm:$0xff]
      %v942 = vld [vmem:[#allocation11 + $0x438] sm:$0xff]
      %v943 = vld [vmem:[#allocation11 + $0x440] sm:$0xff]
      %v944 = vld [vmem:[#allocation11 + $0x448] sm:$0xff]
      %v945 = vld [vmem:[#allocation11 + $0x450] sm:$0xff]
      %v946 = vld [vmem:[#allocation11 + $0x458] sm:$0xff]
      %v947 = vld [vmem:[#allocation11 + $0x460] sm:$0xff]
      %v948 = vld [vmem:[#allocation11 + $0x468] sm:$0xff]
      %v949 = vld [vmem:[#allocation11 + $0x470] sm:$0xff]
      %v950 = vld [vmem:[#allocation11 + $0x478] sm:$0xff]
      %v951 = vld [vmem:[#allocation11 + $0x480] sm:$0xff]
      %v952 = vld [vmem:[#allocation11 + $0x488] sm:$0xff]
      %v953 = vld [vmem:[#allocation11 + $0x490] sm:$0xff]
      %v954 = vld [vmem:[#allocation11 + $0x498] sm:$0xff]
      %v955 = vld [vmem:[#allocation11 + $0x4a0] sm:$0xff]
      %v956 = vld [vmem:[#allocation11 + $0x4a8] sm:$0xff]
      %v957 = vld [vmem:[#allocation11 + $0x4b0] sm:$0xff]
      %v958 = vld [vmem:[#allocation11 + $0x4b8] sm:$0xff]
      %v959 = vld [vmem:[#allocation11 + $0x4c0] sm:$0xff]
      %v960 = vld [vmem:[#allocation11 + $0x4c8] sm:$0xff]
      %v961 = vld [vmem:[#allocation11 + $0x4d0] sm:$0xff]
      %v962 = vld [vmem:[#allocation11 + $0x4d8] sm:$0xff]
      %v963 = vld [vmem:[#allocation11 + $0x4e0] sm:$0xff]
      %v964 = vld [vmem:[#allocation11 + $0x4e8] sm:$0xff]
      %v965 = vld [vmem:[#allocation11 + $0x4f0] sm:$0xff]
      %v966 = vld [vmem:[#allocation11 + $0x4f8] sm:$0xff]
      %v967 = vld [vmem:[#allocation11 + $0x500] sm:$0xff]
      %v968 = vld [vmem:[#allocation11 + $0x508] sm:$0xff]
      %v969 = vld [vmem:[#allocation11 + $0x510] sm:$0xff]
      %v970 = vld [vmem:[#allocation11 + $0x518] sm:$0xff]
      %v971 = vld [vmem:[#allocation11 + $0x520] sm:$0xff]
      %v972 = vld [vmem:[#allocation11 + $0x528] sm:$0xff]
      %v973 = vld [vmem:[#allocation11 + $0x530] sm:$0xff]
      %v974 = vld [vmem:[#allocation11 + $0x538] sm:$0xff]
      %v975 = vld [vmem:[#allocation11 + $0x540] sm:$0xff]
      %v976 = vld [vmem:[#allocation11 + $0x548] sm:$0xff]
      %v977 = vld [vmem:[#allocation11 + $0x550] sm:$0xff]
      %v978 = vld [vmem:[#allocation11 + $0x558] sm:$0xff]
      %v979 = vld [vmem:[#allocation11 + $0x560] sm:$0xff]
      %v980 = vld [vmem:[#allocation11 + $0x568] sm:$0xff]
      %v981 = vld [vmem:[#allocation11 + $0x570] sm:$0xff]
      %v982 = vld [vmem:[#allocation11 + $0x578] sm:$0xff]
      %v983 = vld [vmem:[#allocation11 + $0x580] sm:$0xff]
      %v984 = vld [vmem:[#allocation11 + $0x588] sm:$0xff]
      %v985 = vld [vmem:[#allocation11 + $0x590] sm:$0xff]
      %v986 = vld [vmem:[#allocation11 + $0x598] sm:$0xff]
      %v987 = vld [vmem:[#allocation11 + $0x5a0] sm:$0xff]
      %v988 = vld [vmem:[#allocation11 + $0x5a8] sm:$0xff]
      %v989 = vld [vmem:[#allocation11 + $0x5b0] sm:$0xff]
      %v990 = vld [vmem:[#allocation11 + $0x5b8] sm:$0xff]
      %v991 = vld [vmem:[#allocation11 + $0x5c0] sm:$0xff]
      %v992 = vld [vmem:[#allocation11 + $0x5c8] sm:$0xff]
      %v993 = vld [vmem:[#allocation11 + $0x5d0] sm:$0xff]
      %v994 = vld [vmem:[#allocation11 + $0x5d8] sm:$0xff]
      %v995 = vld [vmem:[#allocation11 + $0x5e0] sm:$0xff]
      %v996 = vld [vmem:[#allocation11 + $0x5e8] sm:$0xff]
      %v997 = vld [vmem:[#allocation11 + $0x5f0] sm:$0xff]
      %v998 = vld [vmem:[#allocation11 + $0x5f8] sm:$0xff]
      %v999 = vld [vmem:[#allocation11 + $0x600] sm:$0xff]
      %v1000 = vld [vmem:[#allocation11 + $0x608] sm:$0xff]
      %v1001 = vld [vmem:[#allocation11 + $0x610] sm:$0xff]
      %v1002 = vld [vmem:[#allocation11 + $0x618] sm:$0xff]
      %v1003 = vld [vmem:[#allocation11 + $0x620] sm:$0xff]
      %v1004 = vld [vmem:[#allocation11 + $0x628] sm:$0xff]
      %v1005 = vld [vmem:[#allocation11 + $0x630] sm:$0xff]
      %v1006 = vld [vmem:[#allocation11 + $0x638] sm:$0xff]
      %v1007 = vld [vmem:[#allocation11 + $0x640] sm:$0xff]
      %v1008 = vld [vmem:[#allocation11 + $0x648] sm:$0xff]
      %v1009 = vld [vmem:[#allocation11 + $0x650] sm:$0xff]
      %v1010 = vld [vmem:[#allocation11 + $0x658] sm:$0xff]
      %v1011 = vld [vmem:[#allocation11 + $0x660] sm:$0xff]
      %v1012 = vld [vmem:[#allocation11 + $0x668] sm:$0xff]
      %v1013 = vld [vmem:[#allocation11 + $0x670] sm:$0xff]
      %v1014 = vld [vmem:[#allocation11 + $0x678] sm:$0xff]
      %v1015 = vld [vmem:[#allocation11 + $0x680] sm:$0xff]
      %v1016 = vld [vmem:[#allocation11 + $0x688] sm:$0xff]
      %v1017 = vld [vmem:[#allocation11 + $0x690] sm:$0xff]
      %v1018 = vld [vmem:[#allocation11 + $0x698] sm:$0xff]
      %v1019 = vld [vmem:[#allocation11 + $0x6a0] sm:$0xff]
      %v1020 = vld [vmem:[#allocation11 + $0x6a8] sm:$0xff]
      %v1021 = vld [vmem:[#allocation11 + $0x6b0] sm:$0xff]
      %v1022 = vld [vmem:[#allocation11 + $0x6b8] sm:$0xff]
      %v1023 = vld [vmem:[#allocation11 + $0x6c0] sm:$0xff]
      %v1024 = vld [vmem:[#allocation11 + $0x6c8] sm:$0xff]
      %v1025 = vld [vmem:[#allocation11 + $0x6d0] sm:$0xff]
      %v1026 = vld [vmem:[#allocation11 + $0x6d8] sm:$0xff]
      %v1027 = vld [vmem:[#allocation11 + $0x6e0] sm:$0xff]
      %v1028 = vld [vmem:[#allocation11 + $0x6e8] sm:$0xff]
      %v1029 = vld [vmem:[#allocation11 + $0x6f0] sm:$0xff]
      %v1030 = vld [vmem:[#allocation11 + $0x6f8] sm:$0xff]
      %v1031 = vld [vmem:[#allocation11 + $0x700] sm:$0xff]
      %v1032 = vld [vmem:[#allocation11 + $0x708] sm:$0xff]
      %v1033 = vld [vmem:[#allocation11 + $0x710] sm:$0xff]
      %v1034 = vld [vmem:[#allocation11 + $0x718] sm:$0xff]
      %v1035 = vld [vmem:[#allocation11 + $0x720] sm:$0xff]
      %v1036 = vld [vmem:[#allocation11 + $0x728] sm:$0xff]
      %v1037 = vld [vmem:[#allocation11 + $0x730] sm:$0xff]
      %v1038 = vld [vmem:[#allocation11 + $0x738] sm:$0xff]
      %v1039 = vld [vmem:[#allocation11 + $0x740] sm:$0xff]
      %v1040 = vld [vmem:[#allocation11 + $0x748] sm:$0xff]
      %v1041 = vld [vmem:[#allocation11 + $0x750] sm:$0xff]
      %v1042 = vld [vmem:[#allocation11 + $0x758] sm:$0xff]
      %v1043 = vld [vmem:[#allocation11 + $0x760] sm:$0xff]
      %v1044 = vld [vmem:[#allocation11 + $0x768] sm:$0xff]
      %v1045 = vld [vmem:[#allocation11 + $0x770] sm:$0xff]
      %v1046 = vld [vmem:[#allocation11 + $0x778] sm:$0xff]
      %v1047 = vld [vmem:[#allocation11 + $0x780] sm:$0xff]
      %v1048 = vld [vmem:[#allocation11 + $0x788] sm:$0xff]
      %v1049 = vld [vmem:[#allocation11 + $0x790] sm:$0xff]
      %v1050 = vld [vmem:[#allocation11 + $0x798] sm:$0xff]
      %v1051 = vld [vmem:[#allocation11 + $0x7a0] sm:$0xff]
      %v1052 = vld [vmem:[#allocation11 + $0x7a8] sm:$0xff]
      %v1053 = vld [vmem:[#allocation11 + $0x7b0] sm:$0xff]
      %v1054 = vld [vmem:[#allocation11 + $0x7b8] sm:$0xff]
      %v1055 = vld [vmem:[#allocation11 + $0x7c0] sm:$0xff]
      %v1056 = vld [vmem:[#allocation11 + $0x7c8] sm:$0xff]
      %v1057 = vld [vmem:[#allocation11 + $0x7d0] sm:$0xff]
      %v1058 = vld [vmem:[#allocation11 + $0x7d8] sm:$0xff]
      %v1059 = vld [vmem:[#allocation11 + $0x7e0] sm:$0xff]
      %v1060 = vld [vmem:[#allocation11 + $0x7e8] sm:$0xff]
      %v1061 = vld [vmem:[#allocation11 + $0x7f0] sm:$0xff]
      %v1062 = vld [vmem:[#allocation11 + $0x7f8] sm:$0xff]
      %v1319 = vunpack.c.l.b16 %v807
      %v1320 = vunpack.c.h.b16 %v807
      %v1321 = vunpack.c.l.b16 %v808
      %v1322 = vunpack.c.h.b16 %v808
      %v1323 = vunpack.c.l.b16 %v809
      %v1324 = vunpack.c.h.b16 %v809
      %v1325 = vunpack.c.l.b16 %v810
      %v1326 = vunpack.c.h.b16 %v810
      %v1327 = vunpack.c.l.b16 %v811
      %v1328 = vunpack.c.h.b16 %v811
      %v1329 = vunpack.c.l.b16 %v812
      %v1330 = vunpack.c.h.b16 %v812
      %v1331 = vunpack.c.l.b16 %v813
      %v1332 = vunpack.c.h.b16 %v813
      %v1333 = vunpack.c.l.b16 %v814
      %v1334 = vunpack.c.h.b16 %v814
      %v1335 = vunpack.c.l.b16 %v815
      %v1336 = vunpack.c.h.b16 %v815
      %v1337 = vunpack.c.l.b16 %v816
      %v1338 = vunpack.c.h.b16 %v816
      %v1339 = vunpack.c.l.b16 %v817
      %v1340 = vunpack.c.h.b16 %v817
      %v1341 = vunpack.c.l.b16 %v818
      %v1342 = vunpack.c.h.b16 %v818
      %v1343 = vunpack.c.l.b16 %v819
      %v1344 = vunpack.c.h.b16 %v819
      %v1345 = vunpack.c.l.b16 %v820
      %v1346 = vunpack.c.h.b16 %v820
      %v1347 = vunpack.c.l.b16 %v821
      %v1348 = vunpack.c.h.b16 %v821
      %v1349 = vunpack.c.l.b16 %v822
      %v1350 = vunpack.c.h.b16 %v822
      %v1351 = vunpack.c.l.b16 %v823
      %v1352 = vunpack.c.h.b16 %v823
      %v1353 = vunpack.c.l.b16 %v824
      %v1354 = vunpack.c.h.b16 %v824
      %v1355 = vunpack.c.l.b16 %v825
      %v1356 = vunpack.c.h.b16 %v825
      %v1357 = vunpack.c.l.b16 %v826
      %v1358 = vunpack.c.h.b16 %v826
      %v1359 = vunpack.c.l.b16 %v827
      %v1360 = vunpack.c.h.b16 %v827
      %v1361 = vunpack.c.l.b16 %v828
      %v1362 = vunpack.c.h.b16 %v828
      %v1363 = vunpack.c.l.b16 %v829
      %v1364 = vunpack.c.h.b16 %v829
      %v1365 = vunpack.c.l.b16 %v830
      %v1366 = vunpack.c.h.b16 %v830
      %v1367 = vunpack.c.l.b16 %v831
      %v1368 = vunpack.c.h.b16 %v831
      %v1369 = vunpack.c.l.b16 %v832
      %v1370 = vunpack.c.h.b16 %v832
      %v1371 = vunpack.c.l.b16 %v833
      %v1372 = vunpack.c.h.b16 %v833
      %v1373 = vunpack.c.l.b16 %v834
      %v1374 = vunpack.c.h.b16 %v834
      %v1375 = vunpack.c.l.b16 %v835
      %v1376 = vunpack.c.h.b16 %v835
      %v1377 = vunpack.c.l.b16 %v836
      %v1378 = vunpack.c.h.b16 %v836
      %v1379 = vunpack.c.l.b16 %v837
      %v1380 = vunpack.c.h.b16 %v837
      %v1381 = vunpack.c.l.b16 %v838
      %v1382 = vunpack.c.h.b16 %v838
      %v1383 = vunpack.c.l.b16 %v839
      %v1384 = vunpack.c.h.b16 %v839
      %v1385 = vunpack.c.l.b16 %v840
      %v1386 = vunpack.c.h.b16 %v840
      %v1387 = vunpack.c.l.b16 %v841
      %v1388 = vunpack.c.h.b16 %v841
      %v1389 = vunpack.c.l.b16 %v842
      %v1390 = vunpack.c.h.b16 %v842
      %v1391 = vunpack.c.l.b16 %v843
      %v1392 = vunpack.c.h.b16 %v843
      %v1393 = vunpack.c.l.b16 %v844
      %v1394 = vunpack.c.h.b16 %v844
      %v1395 = vunpack.c.l.b16 %v845
      %v1396 = vunpack.c.h.b16 %v845
      %v1397 = vunpack.c.l.b16 %v846
      %v1398 = vunpack.c.h.b16 %v846
      %v1399 = vunpack.c.l.b16 %v847
      %v1400 = vunpack.c.h.b16 %v847
      %v1401 = vunpack.c.l.b16 %v848
      %v1402 = vunpack.c.h.b16 %v848
      %v1403 = vunpack.c.l.b16 %v849
      %v1404 = vunpack.c.h.b16 %v849
      %v1405 = vunpack.c.l.b16 %v850
      %v1406 = vunpack.c.h.b16 %v850
      %v1407 = vunpack.c.l.b16 %v851
      %v1408 = vunpack.c.h.b16 %v851
      %v1409 = vunpack.c.l.b16 %v852
      %v1410 = vunpack.c.h.b16 %v852
      %v1411 = vunpack.c.l.b16 %v853
      %v1412 = vunpack.c.h.b16 %v853
      %v1413 = vunpack.c.l.b16 %v854
      %v1414 = vunpack.c.h.b16 %v854
      %v1415 = vunpack.c.l.b16 %v855
      %v1416 = vunpack.c.h.b16 %v855
      %v1417 = vunpack.c.l.b16 %v856
      %v1418 = vunpack.c.h.b16 %v856
      %v1419 = vunpack.c.l.b16 %v857
      %v1420 = vunpack.c.h.b16 %v857
      %v1421 = vunpack.c.l.b16 %v858
      %v1422 = vunpack.c.h.b16 %v858
      %v1423 = vunpack.c.l.b16 %v859
      %v1424 = vunpack.c.h.b16 %v859
      %v1425 = vunpack.c.l.b16 %v860
      %v1426 = vunpack.c.h.b16 %v860
      %v1427 = vunpack.c.l.b16 %v861
      %v1428 = vunpack.c.h.b16 %v861
      %v1429 = vunpack.c.l.b16 %v862
      %v1430 = vunpack.c.h.b16 %v862
      %v1431 = vunpack.c.l.b16 %v863
      %v1432 = vunpack.c.h.b16 %v863
      %v1433 = vunpack.c.l.b16 %v864
      %v1434 = vunpack.c.h.b16 %v864
      %v1435 = vunpack.c.l.b16 %v865
      %v1436 = vunpack.c.h.b16 %v865
      %v1437 = vunpack.c.l.b16 %v866
      %v1438 = vunpack.c.h.b16 %v866
      %v1439 = vunpack.c.l.b16 %v867
      %v1440 = vunpack.c.h.b16 %v867
      %v1441 = vunpack.c.l.b16 %v868
      %v1442 = vunpack.c.h.b16 %v868
      %v1443 = vunpack.c.l.b16 %v869
      %v1444 = vunpack.c.h.b16 %v869
      %v1445 = vunpack.c.l.b16 %v870
      %v1446 = vunpack.c.h.b16 %v870
      %v1447 = vunpack.c.l.b16 %v871
      %v1448 = vunpack.c.h.b16 %v871
      %v1449 = vunpack.c.l.b16 %v872
      %v1450 = vunpack.c.h.b16 %v872
      %v1451 = vunpack.c.l.b16 %v873
      %v1452 = vunpack.c.h.b16 %v873
      %v1453 = vunpack.c.l.b16 %v874
      %v1454 = vunpack.c.h.b16 %v874
      %v1455 = vunpack.c.l.b16 %v875
      %v1456 = vunpack.c.h.b16 %v875
      %v1457 = vunpack.c.l.b16 %v876
      %v1458 = vunpack.c.h.b16 %v876
      %v1459 = vunpack.c.l.b16 %v877
      %v1460 = vunpack.c.h.b16 %v877
      %v1461 = vunpack.c.l.b16 %v878
      %v1462 = vunpack.c.h.b16 %v878
      %v1463 = vunpack.c.l.b16 %v879
      %v1464 = vunpack.c.h.b16 %v879
      %v1465 = vunpack.c.l.b16 %v880
      %v1466 = vunpack.c.h.b16 %v880
      %v1467 = vunpack.c.l.b16 %v881
      %v1468 = vunpack.c.h.b16 %v881
      %v1469 = vunpack.c.l.b16 %v882
      %v1470 = vunpack.c.h.b16 %v882
      %v1471 = vunpack.c.l.b16 %v883
      %v1472 = vunpack.c.h.b16 %v883
      %v1473 = vunpack.c.l.b16 %v884
      %v1474 = vunpack.c.h.b16 %v884
      %v1475 = vunpack.c.l.b16 %v885
      %v1476 = vunpack.c.h.b16 %v885
      %v1477 = vunpack.c.l.b16 %v886
      %v1478 = vunpack.c.h.b16 %v886
      %v1479 = vunpack.c.l.b16 %v887
      %v1480 = vunpack.c.h.b16 %v887
      %v1481 = vunpack.c.l.b16 %v888
      %v1482 = vunpack.c.h.b16 %v888
      %v1483 = vunpack.c.l.b16 %v889
      %v1484 = vunpack.c.h.b16 %v889
      %v1485 = vunpack.c.l.b16 %v890
      %v1486 = vunpack.c.h.b16 %v890
      %v1487 = vunpack.c.l.b16 %v891
      %v1488 = vunpack.c.h.b16 %v891
      %v1489 = vunpack.c.l.b16 %v892
      %v1490 = vunpack.c.h.b16 %v892
      %v1491 = vunpack.c.l.b16 %v893
      %v1492 = vunpack.c.h.b16 %v893
      %v1493 = vunpack.c.l.b16 %v894
      %v1494 = vunpack.c.h.b16 %v894
      %v1495 = vunpack.c.l.b16 %v895
      %v1496 = vunpack.c.h.b16 %v895
      %v1497 = vunpack.c.l.b16 %v896
      %v1498 = vunpack.c.h.b16 %v896
      %v1499 = vunpack.c.l.b16 %v897
      %v1500 = vunpack.c.h.b16 %v897
      %v1501 = vunpack.c.l.b16 %v898
      %v1502 = vunpack.c.h.b16 %v898
      %v1503 = vunpack.c.l.b16 %v899
      %v1504 = vunpack.c.h.b16 %v899
      %v1505 = vunpack.c.l.b16 %v900
      %v1506 = vunpack.c.h.b16 %v900
      %v1507 = vunpack.c.l.b16 %v901
      %v1508 = vunpack.c.h.b16 %v901
      %v1509 = vunpack.c.l.b16 %v902
      %v1510 = vunpack.c.h.b16 %v902
      %v1511 = vunpack.c.l.b16 %v903
      %v1512 = vunpack.c.h.b16 %v903
      %v1513 = vunpack.c.l.b16 %v904
      %v1514 = vunpack.c.h.b16 %v904
      %v1515 = vunpack.c.l.b16 %v905
      %v1516 = vunpack.c.h.b16 %v905
      %v1517 = vunpack.c.l.b16 %v906
      %v1518 = vunpack.c.h.b16 %v906
      %v1519 = vunpack.c.l.b16 %v907
      %v1520 = vunpack.c.h.b16 %v907
      %v1521 = vunpack.c.l.b16 %v908
      %v1522 = vunpack.c.h.b16 %v908
      %v1523 = vunpack.c.l.b16 %v909
      %v1524 = vunpack.c.h.b16 %v909
      %v1525 = vunpack.c.l.b16 %v910
      %v1526 = vunpack.c.h.b16 %v910
      %v1527 = vunpack.c.l.b16 %v911
      %v1528 = vunpack.c.h.b16 %v911
      %v1529 = vunpack.c.l.b16 %v912
      %v1530 = vunpack.c.h.b16 %v912
      %v1531 = vunpack.c.l.b16 %v913
      %v1532 = vunpack.c.h.b16 %v913
      %v1533 = vunpack.c.l.b16 %v914
      %v1534 = vunpack.c.h.b16 %v914
      %v1535 = vunpack.c.l.b16 %v915
      %v1536 = vunpack.c.h.b16 %v915
      %v1537 = vunpack.c.l.b16 %v916
      %v1538 = vunpack.c.h.b16 %v916
      %v1539 = vunpack.c.l.b16 %v917
      %v1540 = vunpack.c.h.b16 %v917
      %v1541 = vunpack.c.l.b16 %v918
      %v1542 = vunpack.c.h.b16 %v918
      %v1543 = vunpack.c.l.b16 %v919
      %v1544 = vunpack.c.h.b16 %v919
      %v1545 = vunpack.c.l.b16 %v920
      %v1546 = vunpack.c.h.b16 %v920
      %v1547 = vunpack.c.l.b16 %v921
      %v1548 = vunpack.c.h.b16 %v921
      %v1549 = vunpack.c.l.b16 %v922
      %v1550 = vunpack.c.h.b16 %v922
      %v1551 = vunpack.c.l.b16 %v923
      %v1552 = vunpack.c.h.b16 %v923
      %v1553 = vunpack.c.l.b16 %v924
      %v1554 = vunpack.c.h.b16 %v924
      %v1555 = vunpack.c.l.b16 %v925
      %v1556 = vunpack.c.h.b16 %v925
      %v1557 = vunpack.c.l.b16 %v926
      %v1558 = vunpack.c.h.b16 %v926
      %v1559 = vunpack.c.l.b16 %v927
      %v1560 = vunpack.c.h.b16 %v927
      %v1561 = vunpack.c.l.b16 %v928
      %v1562 = vunpack.c.h.b16 %v928
      %v1563 = vunpack.c.l.b16 %v929
      %v1564 = vunpack.c.h.b16 %v929
      %v1565 = vunpack.c.l.b16 %v930
      %v1566 = vunpack.c.h.b16 %v930
      %v1567 = vunpack.c.l.b16 %v931
      %v1568 = vunpack.c.h.b16 %v931
      %v1569 = vunpack.c.l.b16 %v932
      %v1570 = vunpack.c.h.b16 %v932
      %v1571 = vunpack.c.l.b16 %v933
      %v1572 = vunpack.c.h.b16 %v933
      %v1573 = vunpack.c.l.b16 %v934
      %v1574 = vunpack.c.h.b16 %v934
      %v1575 = vunpack.c.l.b16 %v935
      %v1576 = vunpack.c.h.b16 %v935
      %v1577 = vunpack.c.l.b16 %v936
      %v1578 = vunpack.c.h.b16 %v936
      %v1579 = vunpack.c.l.b16 %v937
      %v1580 = vunpack.c.h.b16 %v937
      %v1581 = vunpack.c.l.b16 %v938
      %v1582 = vunpack.c.h.b16 %v938
      %v1583 = vunpack.c.l.b16 %v939
      %v1584 = vunpack.c.h.b16 %v939
      %v1585 = vunpack.c.l.b16 %v940
      %v1586 = vunpack.c.h.b16 %v940
      %v1587 = vunpack.c.l.b16 %v941
      %v1588 = vunpack.c.h.b16 %v941
      %v1589 = vunpack.c.l.b16 %v942
      %v1590 = vunpack.c.h.b16 %v942
      %v1591 = vunpack.c.l.b16 %v943
      %v1592 = vunpack.c.h.b16 %v943
      %v1593 = vunpack.c.l.b16 %v944
      %v1594 = vunpack.c.h.b16 %v944
      %v1595 = vunpack.c.l.b16 %v945
      %v1596 = vunpack.c.h.b16 %v945
      %v1597 = vunpack.c.l.b16 %v946
      %v1598 = vunpack.c.h.b16 %v946
      %v1599 = vunpack.c.l.b16 %v947
      %v1600 = vunpack.c.h.b16 %v947
      %v1601 = vunpack.c.l.b16 %v948
      %v1602 = vunpack.c.h.b16 %v948
      %v1603 = vunpack.c.l.b16 %v949
      %v1604 = vunpack.c.h.b16 %v949
      %v1605 = vunpack.c.l.b16 %v950
      %v1606 = vunpack.c.h.b16 %v950
      %v1607 = vunpack.c.l.b16 %v951
      %v1608 = vunpack.c.h.b16 %v951
      %v1609 = vunpack.c.l.b16 %v952
      %v1610 = vunpack.c.h.b16 %v952
      %v1611 = vunpack.c.l.b16 %v953
      %v1612 = vunpack.c.h.b16 %v953
      %v1613 = vunpack.c.l.b16 %v954
      %v1614 = vunpack.c.h.b16 %v954
      %v1615 = vunpack.c.l.b16 %v955
      %v1616 = vunpack.c.h.b16 %v955
      %v1617 = vunpack.c.l.b16 %v956
      %v1618 = vunpack.c.h.b16 %v956
      %v1619 = vunpack.c.l.b16 %v957
      %v1620 = vunpack.c.h.b16 %v957
      %v1621 = vunpack.c.l.b16 %v958
      %v1622 = vunpack.c.h.b16 %v958
      %v1623 = vunpack.c.l.b16 %v959
      %v1624 = vunpack.c.h.b16 %v959
      %v1625 = vunpack.c.l.b16 %v960
      %v1626 = vunpack.c.h.b16 %v960
      %v1627 = vunpack.c.l.b16 %v961
      %v1628 = vunpack.c.h.b16 %v961
      %v1629 = vunpack.c.l.b16 %v962
      %v1630 = vunpack.c.h.b16 %v962
      %v1631 = vunpack.c.l.b16 %v963
      %v1632 = vunpack.c.h.b16 %v963
      %v1633 = vunpack.c.l.b16 %v964
      %v1634 = vunpack.c.h.b16 %v964
      %v1635 = vunpack.c.l.b16 %v965
      %v1636 = vunpack.c.h.b16 %v965
      %v1637 = vunpack.c.l.b16 %v966
      %v1638 = vunpack.c.h.b16 %v966
      %v1639 = vunpack.c.l.b16 %v967
      %v1640 = vunpack.c.h.b16 %v967
      %v1641 = vunpack.c.l.b16 %v968
      %v1642 = vunpack.c.h.b16 %v968
      %v1643 = vunpack.c.l.b16 %v969
      %v1644 = vunpack.c.h.b16 %v969
      %v1645 = vunpack.c.l.b16 %v970
      %v1646 = vunpack.c.h.b16 %v970
      %v1647 = vunpack.c.l.b16 %v971
      %v1648 = vunpack.c.h.b16 %v971
      %v1649 = vunpack.c.l.b16 %v972
      %v1650 = vunpack.c.h.b16 %v972
      %v1651 = vunpack.c.l.b16 %v973
      %v1652 = vunpack.c.h.b16 %v973
      %v1653 = vunpack.c.l.b16 %v974
      %v1654 = vunpack.c.h.b16 %v974
      %v1655 = vunpack.c.l.b16 %v975
      %v1656 = vunpack.c.h.b16 %v975
      %v1657 = vunpack.c.l.b16 %v976
      %v1658 = vunpack.c.h.b16 %v976
      %v1659 = vunpack.c.l.b16 %v977
      %v1660 = vunpack.c.h.b16 %v977
      %v1661 = vunpack.c.l.b16 %v978
      %v1662 = vunpack.c.h.b16 %v978
      %v1663 = vunpack.c.l.b16 %v979
      %v1664 = vunpack.c.h.b16 %v979
      %v1665 = vunpack.c.l.b16 %v980
      %v1666 = vunpack.c.h.b16 %v980
      %v1667 = vunpack.c.l.b16 %v981
      %v1668 = vunpack.c.h.b16 %v981
      %v1669 = vunpack.c.l.b16 %v982
      %v1670 = vunpack.c.h.b16 %v982
      %v1671 = vunpack.c.l.b16 %v983
      %v1672 = vunpack.c.h.b16 %v983
      %v1673 = vunpack.c.l.b16 %v984
      %v1674 = vunpack.c.h.b16 %v984
      %v1675 = vunpack.c.l.b16 %v985
      %v1676 = vunpack.c.h.b16 %v985
      %v1677 = vunpack.c.l.b16 %v986
      %v1678 = vunpack.c.h.b16 %v986
      %v1679 = vunpack.c.l.b16 %v987
      %v1680 = vunpack.c.h.b16 %v987
      %v1681 = vunpack.c.l.b16 %v988
      %v1682 = vunpack.c.h.b16 %v988
      %v1683 = vunpack.c.l.b16 %v989
      %v1684 = vunpack.c.h.b16 %v989
      %v1685 = vunpack.c.l.b16 %v990
      %v1686 = vunpack.c.h.b16 %v990
      %v1687 = vunpack.c.l.b16 %v991
      %v1688 = vunpack.c.h.b16 %v991
      %v1689 = vunpack.c.l.b16 %v992
      %v1690 = vunpack.c.h.b16 %v992
      %v1691 = vunpack.c.l.b16 %v993
      %v1692 = vunpack.c.h.b16 %v993
      %v1693 = vunpack.c.l.b16 %v994
      %v1694 = vunpack.c.h.b16 %v994
      %v1695 = vunpack.c.l.b16 %v995
      %v1696 = vunpack.c.h.b16 %v995
      %v1697 = vunpack.c.l.b16 %v996
      %v1698 = vunpack.c.h.b16 %v996
      %v1699 = vunpack.c.l.b16 %v997
      %v1700 = vunpack.c.h.b16 %v997
      %v1701 = vunpack.c.l.b16 %v998
      %v1702 = vunpack.c.h.b16 %v998
      %v1703 = vunpack.c.l.b16 %v999
      %v1704 = vunpack.c.h.b16 %v999
      %v1705 = vunpack.c.l.b16 %v1000
      %v1706 = vunpack.c.h.b16 %v1000
      %v1707 = vunpack.c.l.b16 %v1001
      %v1708 = vunpack.c.h.b16 %v1001
      %v1709 = vunpack.c.l.b16 %v1002
      %v1710 = vunpack.c.h.b16 %v1002
      %v1711 = vunpack.c.l.b16 %v1003
      %v1712 = vunpack.c.h.b16 %v1003
      %v1713 = vunpack.c.l.b16 %v1004
      %v1714 = vunpack.c.h.b16 %v1004
      %v1715 = vunpack.c.l.b16 %v1005
      %v1716 = vunpack.c.h.b16 %v1005
      %v1717 = vunpack.c.l.b16 %v1006
      %v1718 = vunpack.c.h.b16 %v1006
      %v1719 = vunpack.c.l.b16 %v1007
      %v1720 = vunpack.c.h.b16 %v1007
      %v1721 = vunpack.c.l.b16 %v1008
      %v1722 = vunpack.c.h.b16 %v1008
      %v1723 = vunpack.c.l.b16 %v1009
      %v1724 = vunpack.c.h.b16 %v1009
      %v1725 = vunpack.c.l.b16 %v1010
      %v1726 = vunpack.c.h.b16 %v1010
      %v1727 = vunpack.c.l.b16 %v1011
      %v1728 = vunpack.c.h.b16 %v1011
      %v1729 = vunpack.c.l.b16 %v1012
      %v1730 = vunpack.c.h.b16 %v1012
      %v1731 = vunpack.c.l.b16 %v1013
      %v1732 = vunpack.c.h.b16 %v1013
      %v1733 = vunpack.c.l.b16 %v1014
      %v1734 = vunpack.c.h.b16 %v1014
      %v1735 = vunpack.c.l.b16 %v1015
      %v1736 = vunpack.c.h.b16 %v1015
      %v1737 = vunpack.c.l.b16 %v1016
      %v1738 = vunpack.c.h.b16 %v1016
      %v1739 = vunpack.c.l.b16 %v1017
      %v1740 = vunpack.c.h.b16 %v1017
      %v1741 = vunpack.c.l.b16 %v1018
      %v1742 = vunpack.c.h.b16 %v1018
      %v1743 = vunpack.c.l.b16 %v1019
      %v1744 = vunpack.c.h.b16 %v1019
      %v1745 = vunpack.c.l.b16 %v1020
      %v1746 = vunpack.c.h.b16 %v1020
      %v1747 = vunpack.c.l.b16 %v1021
      %v1748 = vunpack.c.h.b16 %v1021
      %v1749 = vunpack.c.l.b16 %v1022
      %v1750 = vunpack.c.h.b16 %v1022
      %v1751 = vunpack.c.l.b16 %v1023
      %v1752 = vunpack.c.h.b16 %v1023
      %v1753 = vunpack.c.l.b16 %v1024
      %v1754 = vunpack.c.h.b16 %v1024
      %v1755 = vunpack.c.l.b16 %v1025
      %v1756 = vunpack.c.h.b16 %v1025
      %v1757 = vunpack.c.l.b16 %v1026
      %v1758 = vunpack.c.h.b16 %v1026
      %v1759 = vunpack.c.l.b16 %v1027
      %v1760 = vunpack.c.h.b16 %v1027
      %v1761 = vunpack.c.l.b16 %v1028
      %v1762 = vunpack.c.h.b16 %v1028
      %v1763 = vunpack.c.l.b16 %v1029
      %v1764 = vunpack.c.h.b16 %v1029
      %v1765 = vunpack.c.l.b16 %v1030
      %v1766 = vunpack.c.h.b16 %v1030
      %v1767 = vunpack.c.l.b16 %v1031
      %v1768 = vunpack.c.h.b16 %v1031
      %v1769 = vunpack.c.l.b16 %v1032
      %v1770 = vunpack.c.h.b16 %v1032
      %v1771 = vunpack.c.l.b16 %v1033
      %v1772 = vunpack.c.h.b16 %v1033
      %v1773 = vunpack.c.l.b16 %v1034
      %v1774 = vunpack.c.h.b16 %v1034
      %v1775 = vunpack.c.l.b16 %v1035
      %v1776 = vunpack.c.h.b16 %v1035
      %v1777 = vunpack.c.l.b16 %v1036
      %v1778 = vunpack.c.h.b16 %v1036
      %v1779 = vunpack.c.l.b16 %v1037
      %v1780 = vunpack.c.h.b16 %v1037
      %v1781 = vunpack.c.l.b16 %v1038
      %v1782 = vunpack.c.h.b16 %v1038
      %v1783 = vunpack.c.l.b16 %v1039
      %v1784 = vunpack.c.h.b16 %v1039
      %v1785 = vunpack.c.l.b16 %v1040
      %v1786 = vunpack.c.h.b16 %v1040
      %v1787 = vunpack.c.l.b16 %v1041
      %v1788 = vunpack.c.h.b16 %v1041
      %v1789 = vunpack.c.l.b16 %v1042
      %v1790 = vunpack.c.h.b16 %v1042
      %v1791 = vunpack.c.l.b16 %v1043
      %v1792 = vunpack.c.h.b16 %v1043
      %v1793 = vunpack.c.l.b16 %v1044
      %v1794 = vunpack.c.h.b16 %v1044
      %v1795 = vunpack.c.l.b16 %v1045
      %v1796 = vunpack.c.h.b16 %v1045
      %v1797 = vunpack.c.l.b16 %v1046
      %v1798 = vunpack.c.h.b16 %v1046
      %v1799 = vunpack.c.l.b16 %v1047
      %v1800 = vunpack.c.h.b16 %v1047
      %v1801 = vunpack.c.l.b16 %v1048
      %v1802 = vunpack.c.h.b16 %v1048
      %v1803 = vunpack.c.l.b16 %v1049
      %v1804 = vunpack.c.h.b16 %v1049
      %v1805 = vunpack.c.l.b16 %v1050
      %v1806 = vunpack.c.h.b16 %v1050
      %v1807 = vunpack.c.l.b16 %v1051
      %v1808 = vunpack.c.h.b16 %v1051
      %v1809 = vunpack.c.l.b16 %v1052
      %v1810 = vunpack.c.h.b16 %v1052
      %v1811 = vunpack.c.l.b16 %v1053
      %v1812 = vunpack.c.h.b16 %v1053
      %v1813 = vunpack.c.l.b16 %v1054
      %v1814 = vunpack.c.h.b16 %v1054
      %v1815 = vunpack.c.l.b16 %v1055
      %v1816 = vunpack.c.h.b16 %v1055
      %v1817 = vunpack.c.l.b16 %v1056
      %v1818 = vunpack.c.h.b16 %v1056
      %v1819 = vunpack.c.l.b16 %v1057
      %v1820 = vunpack.c.h.b16 %v1057
      %v1821 = vunpack.c.l.b16 %v1058
      %v1822 = vunpack.c.h.b16 %v1058
      %v1823 = vunpack.c.l.b16 %v1059
      %v1824 = vunpack.c.h.b16 %v1059
      %v1825 = vunpack.c.l.b16 %v1060
      %v1826 = vunpack.c.h.b16 %v1060
      %v1827 = vunpack.c.l.b16 %v1061
      %v1828 = vunpack.c.h.b16 %v1061
      %v1829 = vunpack.c.l.b16 %v1062
      %v1830 = vunpack.c.h.b16 %v1062
      %v1831 = vpack.c.b16 %v1327, %v1319
      %v1832 = vpack.c.b16 %v1328, %v1320
      %v1833 = vpack.c.b16 %v1329, %v1321
      %v1834 = vpack.c.b16 %v1330, %v1322
      %v1835 = vpack.c.b16 %v1331, %v1323
      %v1836 = vpack.c.b16 %v1332, %v1324
      %v1837 = vpack.c.b16 %v1333, %v1325
      %v1838 = vpack.c.b16 %v1334, %v1326
      %v1839 = vpack.c.b16 %v1343, %v1335
      %v1840 = vpack.c.b16 %v1344, %v1336
      %v1841 = vpack.c.b16 %v1345, %v1337
      %v1842 = vpack.c.b16 %v1346, %v1338
      %v1843 = vpack.c.b16 %v1347, %v1339
      %v1844 = vpack.c.b16 %v1348, %v1340
      %v1845 = vpack.c.b16 %v1349, %v1341
      %v1846 = vpack.c.b16 %v1350, %v1342
      %v1847 = vpack.c.b16 %v1359, %v1351
      %v1848 = vpack.c.b16 %v1360, %v1352
      %v1849 = vpack.c.b16 %v1361, %v1353
      %v1850 = vpack.c.b16 %v1362, %v1354
      %v1851 = vpack.c.b16 %v1363, %v1355
      %v1852 = vpack.c.b16 %v1364, %v1356
      %v1853 = vpack.c.b16 %v1365, %v1357
      %v1854 = vpack.c.b16 %v1366, %v1358
      %v1855 = vpack.c.b16 %v1375, %v1367
      %v1856 = vpack.c.b16 %v1376, %v1368
      %v1857 = vpack.c.b16 %v1377, %v1369
      %v1858 = vpack.c.b16 %v1378, %v1370
      %v1859 = vpack.c.b16 %v1379, %v1371
      %v1860 = vpack.c.b16 %v1380, %v1372
      %v1861 = vpack.c.b16 %v1381, %v1373
      %v1862 = vpack.c.b16 %v1382, %v1374
      %v1863 = vpack.c.b16 %v1391, %v1383
      %v1864 = vpack.c.b16 %v1392, %v1384
      %v1865 = vpack.c.b16 %v1393, %v1385
      %v1866 = vpack.c.b16 %v1394, %v1386
      %v1867 = vpack.c.b16 %v1395, %v1387
      %v1868 = vpack.c.b16 %v1396, %v1388
      %v1869 = vpack.c.b16 %v1397, %v1389
      %v1870 = vpack.c.b16 %v1398, %v1390
      %v1871 = vpack.c.b16 %v1407, %v1399
      %v1872 = vpack.c.b16 %v1408, %v1400
      %v1873 = vpack.c.b16 %v1409, %v1401
      %v1874 = vpack.c.b16 %v1410, %v1402
      %v1875 = vpack.c.b16 %v1411, %v1403
      %v1876 = vpack.c.b16 %v1412, %v1404
      %v1877 = vpack.c.b16 %v1413, %v1405
      %v1878 = vpack.c.b16 %v1414, %v1406
      %v1879 = vpack.c.b16 %v1423, %v1415
      %v1880 = vpack.c.b16 %v1424, %v1416
      %v1881 = vpack.c.b16 %v1425, %v1417
      %v1882 = vpack.c.b16 %v1426, %v1418
      %v1883 = vpack.c.b16 %v1427, %v1419
      %v1884 = vpack.c.b16 %v1428, %v1420
      %v1885 = vpack.c.b16 %v1429, %v1421
      %v1886 = vpack.c.b16 %v1430, %v1422
      %v1887 = vpack.c.b16 %v1439, %v1431
      %v1888 = vpack.c.b16 %v1440, %v1432
      %v1889 = vpack.c.b16 %v1441, %v1433
      %v1890 = vpack.c.b16 %v1442, %v1434
      %v1891 = vpack.c.b16 %v1443, %v1435
      %v1892 = vpack.c.b16 %v1444, %v1436
      %v1893 = vpack.c.b16 %v1445, %v1437
      %v1894 = vpack.c.b16 %v1446, %v1438
      %v1895 = vpack.c.b16 %v1455, %v1447
      %v1896 = vpack.c.b16 %v1456, %v1448
      %v1897 = vpack.c.b16 %v1457, %v1449
      %v1898 = vpack.c.b16 %v1458, %v1450
      %v1899 = vpack.c.b16 %v1459, %v1451
      %v1900 = vpack.c.b16 %v1460, %v1452
      %v1901 = vpack.c.b16 %v1461, %v1453
      %v1902 = vpack.c.b16 %v1462, %v1454
      %v1903 = vpack.c.b16 %v1471, %v1463
      %v1904 = vpack.c.b16 %v1472, %v1464
      %v1905 = vpack.c.b16 %v1473, %v1465
      %v1906 = vpack.c.b16 %v1474, %v1466
      %v1907 = vpack.c.b16 %v1475, %v1467
      %v1908 = vpack.c.b16 %v1476, %v1468
      %v1909 = vpack.c.b16 %v1477, %v1469
      %v1910 = vpack.c.b16 %v1478, %v1470
      %v1911 = vpack.c.b16 %v1487, %v1479
      %v1912 = vpack.c.b16 %v1488, %v1480
      %v1913 = vpack.c.b16 %v1489, %v1481
      %v1914 = vpack.c.b16 %v1490, %v1482
      %v1915 = vpack.c.b16 %v1491, %v1483
      %v1916 = vpack.c.b16 %v1492, %v1484
      %v1917 = vpack.c.b16 %v1493, %v1485
      %v1918 = vpack.c.b16 %v1494, %v1486
      %v1919 = vpack.c.b16 %v1503, %v1495
      %v1920 = vpack.c.b16 %v1504, %v1496
      %v1921 = vpack.c.b16 %v1505, %v1497
      %v1922 = vpack.c.b16 %v1506, %v1498
      %v1923 = vpack.c.b16 %v1507, %v1499
      %v1924 = vpack.c.b16 %v1508, %v1500
      %v1925 = vpack.c.b16 %v1509, %v1501
      %v1926 = vpack.c.b16 %v1510, %v1502
      %v1927 = vpack.c.b16 %v1519, %v1511
      %v1928 = vpack.c.b16 %v1520, %v1512
      %v1929 = vpack.c.b16 %v1521, %v1513
      %v1930 = vpack.c.b16 %v1522, %v1514
      %v1931 = vpack.c.b16 %v1523, %v1515
      %v1932 = vpack.c.b16 %v1524, %v1516
      %v1933 = vpack.c.b16 %v1525, %v1517
      %v1934 = vpack.c.b16 %v1526, %v1518
      %v1935 = vpack.c.b16 %v1535, %v1527
      %v1936 = vpack.c.b16 %v1536, %v1528
      %v1937 = vpack.c.b16 %v1537, %v1529
      %v1938 = vpack.c.b16 %v1538, %v1530
      %v1939 = vpack.c.b16 %v1539, %v1531
      %v1940 = vpack.c.b16 %v1540, %v1532
      %v1941 = vpack.c.b16 %v1541, %v1533
      %v1942 = vpack.c.b16 %v1542, %v1534
      %v1943 = vpack.c.b16 %v1551, %v1543
      %v1944 = vpack.c.b16 %v1552, %v1544
      %v1945 = vpack.c.b16 %v1553, %v1545
      %v1946 = vpack.c.b16 %v1554, %v1546
      %v1947 = vpack.c.b16 %v1555, %v1547
      %v1948 = vpack.c.b16 %v1556, %v1548
      %v1949 = vpack.c.b16 %v1557, %v1549
      %v1950 = vpack.c.b16 %v1558, %v1550
      %v1951 = vpack.c.b16 %v1567, %v1559
      %v1952 = vpack.c.b16 %v1568, %v1560
      %v1953 = vpack.c.b16 %v1569, %v1561
      %v1954 = vpack.c.b16 %v1570, %v1562
      %v1955 = vpack.c.b16 %v1571, %v1563
      %v1956 = vpack.c.b16 %v1572, %v1564
      %v1957 = vpack.c.b16 %v1573, %v1565
      %v1958 = vpack.c.b16 %v1574, %v1566
      %v1959 = vpack.c.b16 %v1583, %v1575
      %v1960 = vpack.c.b16 %v1584, %v1576
      %v1961 = vpack.c.b16 %v1585, %v1577
      %v1962 = vpack.c.b16 %v1586, %v1578
      %v1963 = vpack.c.b16 %v1587, %v1579
      %v1964 = vpack.c.b16 %v1588, %v1580
      %v1965 = vpack.c.b16 %v1589, %v1581
      %v1966 = vpack.c.b16 %v1590, %v1582
      %v1967 = vpack.c.b16 %v1599, %v1591
      %v1968 = vpack.c.b16 %v1600, %v1592
      %v1969 = vpack.c.b16 %v1601, %v1593
      %v1970 = vpack.c.b16 %v1602, %v1594
      %v1971 = vpack.c.b16 %v1603, %v1595
      %v1972 = vpack.c.b16 %v1604, %v1596
      %v1973 = vpack.c.b16 %v1605, %v1597
      %v1974 = vpack.c.b16 %v1606, %v1598
      %v1975 = vpack.c.b16 %v1615, %v1607
      %v1976 = vpack.c.b16 %v1616, %v1608
      %v1977 = vpack.c.b16 %v1617, %v1609
      %v1978 = vpack.c.b16 %v1618, %v1610
      %v1979 = vpack.c.b16 %v1619, %v1611
      %v1980 = vpack.c.b16 %v1620, %v1612
      %v1981 = vpack.c.b16 %v1621, %v1613
      %v1982 = vpack.c.b16 %v1622, %v1614
      %v1983 = vpack.c.b16 %v1631, %v1623
      %v1984 = vpack.c.b16 %v1632, %v1624
      %v1985 = vpack.c.b16 %v1633, %v1625
      %v1986 = vpack.c.b16 %v1634, %v1626
      %v1987 = vpack.c.b16 %v1635, %v1627
      %v1988 = vpack.c.b16 %v1636, %v1628
      %v1989 = vpack.c.b16 %v1637, %v1629
      %v1990 = vpack.c.b16 %v1638, %v1630
      %v1991 = vpack.c.b16 %v1647, %v1639
      %v1992 = vpack.c.b16 %v1648, %v1640
      %v1993 = vpack.c.b16 %v1649, %v1641
      %v1994 = vpack.c.b16 %v1650, %v1642
      %v1995 = vpack.c.b16 %v1651, %v1643
      %v1996 = vpack.c.b16 %v1652, %v1644
      %v1997 = vpack.c.b16 %v1653, %v1645
      %v1998 = vpack.c.b16 %v1654, %v1646
      %v1999 = vpack.c.b16 %v1663, %v1655
      %v2000 = vpack.c.b16 %v1664, %v1656
      %v2001 = vpack.c.b16 %v1665, %v1657
      %v2002 = vpack.c.b16 %v1666, %v1658
      %v2003 = vpack.c.b16 %v1667, %v1659
      %v2004 = vpack.c.b16 %v1668, %v1660
      %v2005 = vpack.c.b16 %v1669, %v1661
      %v2006 = vpack.c.b16 %v1670, %v1662
      %v2007 = vpack.c.b16 %v1679, %v1671
      %v2008 = vpack.c.b16 %v1680, %v1672
      %v2009 = vpack.c.b16 %v1681, %v1673
      %v2010 = vpack.c.b16 %v1682, %v1674
      %v2011 = vpack.c.b16 %v1683, %v1675
      %v2012 = vpack.c.b16 %v1684, %v1676
      %v2013 = vpack.c.b16 %v1685, %v1677
      %v2014 = vpack.c.b16 %v1686, %v1678
      %v2015 = vpack.c.b16 %v1695, %v1687
      %v2016 = vpack.c.b16 %v1696, %v1688
      %v2017 = vpack.c.b16 %v1697, %v1689
      %v2018 = vpack.c.b16 %v1698, %v1690
      %v2019 = vpack.c.b16 %v1699, %v1691
      %v2020 = vpack.c.b16 %v1700, %v1692
      %v2021 = vpack.c.b16 %v1701, %v1693
      %v2022 = vpack.c.b16 %v1702, %v1694
      %v2023 = vpack.c.b16 %v1711, %v1703
      %v2024 = vpack.c.b16 %v1712, %v1704
      %v2025 = vpack.c.b16 %v1713, %v1705
      %v2026 = vpack.c.b16 %v1714, %v1706
      %v2027 = vpack.c.b16 %v1715, %v1707
      %v2028 = vpack.c.b16 %v1716, %v1708
      %v2029 = vpack.c.b16 %v1717, %v1709
      %v2030 = vpack.c.b16 %v1718, %v1710
      %v2031 = vpack.c.b16 %v1727, %v1719
      %v2032 = vpack.c.b16 %v1728, %v1720
      %v2033 = vpack.c.b16 %v1729, %v1721
      %v2034 = vpack.c.b16 %v1730, %v1722
      %v2035 = vpack.c.b16 %v1731, %v1723
      %v2036 = vpack.c.b16 %v1732, %v1724
      %v2037 = vpack.c.b16 %v1733, %v1725
      %v2038 = vpack.c.b16 %v1734, %v1726
      %v2039 = vpack.c.b16 %v1743, %v1735
      %v2040 = vpack.c.b16 %v1744, %v1736
      %v2041 = vpack.c.b16 %v1745, %v1737
      %v2042 = vpack.c.b16 %v1746, %v1738
      %v2043 = vpack.c.b16 %v1747, %v1739
      %v2044 = vpack.c.b16 %v1748, %v1740
      %v2045 = vpack.c.b16 %v1749, %v1741
      %v2046 = vpack.c.b16 %v1750, %v1742
      %v2047 = vpack.c.b16 %v1759, %v1751
      %v2048 = vpack.c.b16 %v1760, %v1752
      %v2049 = vpack.c.b16 %v1761, %v1753
      %v2050 = vpack.c.b16 %v1762, %v1754
      %v2051 = vpack.c.b16 %v1763, %v1755
      %v2052 = vpack.c.b16 %v1764, %v1756
      %v2053 = vpack.c.b16 %v1765, %v1757
      %v2054 = vpack.c.b16 %v1766, %v1758
      %v2055 = vpack.c.b16 %v1775, %v1767
      %v2056 = vpack.c.b16 %v1776, %v1768
      %v2057 = vpack.c.b16 %v1777, %v1769
      %v2058 = vpack.c.b16 %v1778, %v1770
      %v2059 = vpack.c.b16 %v1779, %v1771
      %v2060 = vpack.c.b16 %v1780, %v1772
      %v2061 = vpack.c.b16 %v1781, %v1773
      %v2062 = vpack.c.b16 %v1782, %v1774
      %v2063 = vpack.c.b16 %v1791, %v1783
      %v2064 = vpack.c.b16 %v1792, %v1784
      %v2065 = vpack.c.b16 %v1793, %v1785
      %v2066 = vpack.c.b16 %v1794, %v1786
      %v2067 = vpack.c.b16 %v1795, %v1787
      %v2068 = vpack.c.b16 %v1796, %v1788
      %v2069 = vpack.c.b16 %v1797, %v1789
      %v2070 = vpack.c.b16 %v1798, %v1790
      %v2071 = vpack.c.b16 %v1807, %v1799
      %v2072 = vpack.c.b16 %v1808, %v1800
      %v2073 = vpack.c.b16 %v1809, %v1801
      %v2074 = vpack.c.b16 %v1810, %v1802
      %v2075 = vpack.c.b16 %v1811, %v1803
      %v2076 = vpack.c.b16 %v1812, %v1804
      %v2077 = vpack.c.b16 %v1813, %v1805
      %v2078 = vpack.c.b16 %v1814, %v1806
      %v2079 = vpack.c.b16 %v1823, %v1815
      %v2080 = vpack.c.b16 %v1824, %v1816
      %v2081 = vpack.c.b16 %v1825, %v1817
      %v2082 = vpack.c.b16 %v1826, %v1818
      %v2083 = vpack.c.b16 %v1827, %v1819
      %v2084 = vpack.c.b16 %v1828, %v1820
      %v2085 = vpack.c.b16 %v1829, %v1821
      %v2086 = vpack.c.b16 %v1830, %v1822
      %2343 = vmatprep.subr.bf16.mxu0 %v1888
      %2344 = vmatpush1.bf16.msra.mxu0 %v1887
      %2345 = vmatprep.subr.bf16.mxu0 %v1880
      %2346 = vmatpush1.bf16.msra.mxu0 %v1879
      %2347 = vmatprep.subr.bf16.mxu0 %v1872
      %2348 = vmatpush1.bf16.msra.mxu0 %v1871
      %2349 = vmatprep.subr.bf16.mxu0 %v1864
      %2350 = vmatpush1.bf16.msra.mxu0 %v1863
      %2351 = vmatprep.subr.bf16.mxu0 %v1856
      %2352 = vmatpush1.bf16.msra.mxu0 %v1855
      %2353 = vmatprep.subr.bf16.mxu0 %v1848
      %2354 = vmatpush1.bf16.msra.mxu0 %v1847
      %2355 = vmatprep.subr.bf16.mxu0 %v1840
      %2356 = vmatpush1.bf16.msra.mxu0 %v1839
      %2357 = vmatprep.subr.bf16.mxu0 %v1832
      %2358 = vmatpush1.bf16.msra.mxu0 %v1831
      %2359 = vmatprep.subr.bf16.mxu0 %v1952
      %2360 = vmatpush2.bf16.msra.mxu0 %v1951
      %2361 = vmatprep.subr.bf16.mxu0 %v1944
      %2362 = vmatpush2.bf16.msra.mxu0 %v1943
      %2363 = vmatprep.subr.bf16.mxu0 %v1936
      %2364 = vmatpush2.bf16.msra.mxu0 %v1935
      %2365 = vmatprep.subr.bf16.mxu0 %v1928
      %2366 = vmatpush2.bf16.msra.mxu0 %v1927
      %2367 = vmatprep.subr.bf16.mxu0 %v1920
      %2368 = vmatpush2.bf16.msra.mxu0 %v1919
      %2369 = vmatprep.subr.bf16.mxu0 %v1912
      %2370 = vmatpush2.bf16.msra.mxu0 %v1911
      %2371 = vmatprep.subr.bf16.mxu0 %v1904
      %2372 = vmatpush2.bf16.msra.mxu0 %v1903
      %2373 = vmatprep.subr.bf16.mxu0 %v1896
      %2374 = vmatpush2.bf16.msra.mxu0 %v1895
      %2375 = vmatprep.mubr.bf16.mxu0 %v804
      %2376 = vmatmul.mubr.bf16.gmra.mxu0 %v803
      %v2377 = vpop.f32.mrf.mxu0
      %v2378 = vadd.f32 0.0, %v2377
      %v2379 = vpop.f32.mrf.mxu0
      %v2380 = vadd.f32 0.0, %v2379
      %v2381 = vpop.f32.mrf.mxu0
      %v2382 = vadd.f32 0.0, %v2381
      %v2383 = vpop.f32.mrf.mxu0
      %v2384 = vadd.f32 0.0, %v2383
      %2385 = vdwg.mxu0
      %2386 = vmatprep.subr.bf16.mxu0 %v2016
      %2387 = vmatpush1.bf16.msra.mxu0 %v2015
      %2388 = vmatprep.subr.bf16.mxu0 %v2008
      %2389 = vmatpush1.bf16.msra.mxu0 %v2007
      %2390 = vmatprep.subr.bf16.mxu0 %v2000
      %2391 = vmatpush1.bf16.msra.mxu0 %v1999
      %2392 = vmatprep.subr.bf16.mxu0 %v1992
      %2393 = vmatpush1.bf16.msra.mxu0 %v1991
      %2394 = vmatprep.subr.bf16.mxu0 %v1984
      %2395 = vmatpush1.bf16.msra.mxu0 %v1983
      %2396 = vmatprep.subr.bf16.mxu0 %v1976
      %2397 = vmatpush1.bf16.msra.mxu0 %v1975
      %2398 = vmatprep.subr.bf16.mxu0 %v1968
      %2399 = vmatpush1.bf16.msra.mxu0 %v1967
      %2400 = vmatprep.subr.bf16.mxu0 %v1960
      %2401 = vmatpush1.bf16.msra.mxu0 %v1959
      %2402 = vmatprep.subr.bf16.mxu0 %v2080
      %2403 = vmatpush2.bf16.msra.mxu0 %v2079
      %2404 = vmatprep.subr.bf16.mxu0 %v2072
      %2405 = vmatpush2.bf16.msra.mxu0 %v2071
      %2406 = vmatprep.subr.bf16.mxu0 %v2064
      %2407 = vmatpush2.bf16.msra.mxu0 %v2063
      %2408 = vmatprep.subr.bf16.mxu0 %v2056
      %2409 = vmatpush2.bf16.msra.mxu0 %v2055
      %2410 = vmatprep.subr.bf16.mxu0 %v2048
      %2411 = vmatpush2.bf16.msra.mxu0 %v2047
      %2412 = vmatprep.subr.bf16.mxu0 %v2040
      %2413 = vmatpush2.bf16.msra.mxu0 %v2039
      %2414 = vmatprep.subr.bf16.mxu0 %v2032
      %2415 = vmatpush2.bf16.msra.mxu0 %v2031
      %2416 = vmatprep.subr.bf16.mxu0 %v2024
      %2417 = vmatpush2.bf16.msra.mxu0 %v2023
      %2418 = vmatprep.mubr.bf16.mxu0 %v806
      %2419 = vmatmul.mubr.bf16.gmra.mxu0 %v805
      %v2420 = vpop.f32.mrf.mxu0
      %v2421 = vadd.f32 %v2378, %v2420
      %v2422 = vpop.f32.mrf.mxu0
      %v2423 = vadd.f32 %v2380, %v2422
      %v2424 = vpop.f32.mrf.mxu0
      %v2425 = vadd.f32 %v2382, %v2424
      %v2426 = vpop.f32.mrf.mxu0
      %v2427 = vadd.f32 %v2384, %v2426
      %2428 = vdwg.mxu0
      %2429 = vmatprep.subr.bf16.mxu0 %v1890
      %2430 = vmatpush1.bf16.msra.mxu0 %v1889
      %2431 = vmatprep.subr.bf16.mxu0 %v1882
      %2432 = vmatpush1.bf16.msra.mxu0 %v1881
      %2433 = vmatprep.subr.bf16.mxu0 %v1874
      %2434 = vmatpush1.bf16.msra.mxu0 %v1873
      %2435 = vmatprep.subr.bf16.mxu0 %v1866
      %2436 = vmatpush1.bf16.msra.mxu0 %v1865
      %2437 = vmatprep.subr.bf16.mxu0 %v1858
      %2438 = vmatpush1.bf16.msra.mxu0 %v1857
      %2439 = vmatprep.subr.bf16.mxu0 %v1850
      %2440 = vmatpush1.bf16.msra.mxu0 %v1849
      %2441 = vmatprep.subr.bf16.mxu0 %v1842
      %2442 = vmatpush1.bf16.msra.mxu0 %v1841
      %2443 = vmatprep.subr.bf16.mxu0 %v1834
      %2444 = vmatpush1.bf16.msra.mxu0 %v1833
      %2445 = vmatprep.subr.bf16.mxu0 %v1954
      %2446 = vmatpush2.bf16.msra.mxu0 %v1953
      %2447 = vmatprep.subr.bf16.mxu0 %v1946
      %2448 = vmatpush2.bf16.msra.mxu0 %v1945
      %2449 = vmatprep.subr.bf16.mxu0 %v1938
      %2450 = vmatpush2.bf16.msra.mxu0 %v1937
      %2451 = vmatprep.subr.bf16.mxu0 %v1930
      %2452 = vmatpush2.bf16.msra.mxu0 %v1929
      %2453 = vmatprep.subr.bf16.mxu0 %v1922
      %2454 = vmatpush2.bf16.msra.mxu0 %v1921
      %2455 = vmatprep.subr.bf16.mxu0 %v1914
      %2456 = vmatpush2.bf16.msra.mxu0 %v1913
      %2457 = vmatprep.subr.bf16.mxu0 %v1906
      %2458 = vmatpush2.bf16.msra.mxu0 %v1905
      %2459 = vmatprep.subr.bf16.mxu0 %v1898
      %2460 = vmatpush2.bf16.msra.mxu0 %v1897
      %2461 = vmatprep.mubr.bf16.mxu0 %v804
      %2462 = vmatmul.mubr.bf16.gmra.mxu0 %v803
      %v2463 = vpop.f32.mrf.mxu0
      %v2464 = vadd.f32 0.0, %v2463
      %v2465 = vpop.f32.mrf.mxu0
      %v2466 = vadd.f32 0.0, %v2465
      %v2467 = vpop.f32.mrf.mxu0
      %v2468 = vadd.f32 0.0, %v2467
      %v2469 = vpop.f32.mrf.mxu0
      %v2470 = vadd.f32 0.0, %v2469
      %2471 = vdwg.mxu0
      %2472 = vmatprep.subr.bf16.mxu0 %v2018
      %2473 = vmatpush1.bf16.msra.mxu0 %v2017
      %2474 = vmatprep.subr.bf16.mxu0 %v2010
      %2475 = vmatpush1.bf16.msra.mxu0 %v2009
      %2476 = vmatprep.subr.bf16.mxu0 %v2002
      %2477 = vmatpush1.bf16.msra.mxu0 %v2001
      %2478 = vmatprep.subr.bf16.mxu0 %v1994
      %2479 = vmatpush1.bf16.msra.mxu0 %v1993
      %2480 = vmatprep.subr.bf16.mxu0 %v1986
      %2481 = vmatpush1.bf16.msra.mxu0 %v1985
      %2482 = vmatprep.subr.bf16.mxu0 %v1978
      %2483 = vmatpush1.bf16.msra.mxu0 %v1977
      %2484 = vmatprep.subr.bf16.mxu0 %v1970
      %2485 = vmatpush1.bf16.msra.mxu0 %v1969
      %2486 = vmatprep.subr.bf16.mxu0 %v1962
      %2487 = vmatpush1.bf16.msra.mxu0 %v1961
      %2488 = vmatprep.subr.bf16.mxu0 %v2082
      %2489 = vmatpush2.bf16.msra.mxu0 %v2081
      %2490 = vmatprep.subr.bf16.mxu0 %v2074
      %2491 = vmatpush2.bf16.msra.mxu0 %v2073
      %2492 = vmatprep.subr.bf16.mxu0 %v2066
      %2493 = vmatpush2.bf16.msra.mxu0 %v2065
      %2494 = vmatprep.subr.bf16.mxu0 %v2058
      %2495 = vmatpush2.bf16.msra.mxu0 %v2057
      %2496 = vmatprep.subr.bf16.mxu0 %v2050
      %2497 = vmatpush2.bf16.msra.mxu0 %v2049
      %2498 = vmatprep.subr.bf16.mxu0 %v2042
      %2499 = vmatpush2.bf16.msra.mxu0 %v2041
      %2500 = vmatprep.subr.bf16.mxu0 %v2034
      %2501 = vmatpush2.bf16.msra.mxu0 %v2033
      %2502 = vmatprep.subr.bf16.mxu0 %v2026
      %2503 = vmatpush2.bf16.msra.mxu0 %v2025
      %2504 = vmatprep.mubr.bf16.mxu0 %v806
      %2505 = vmatmul.mubr.bf16.gmra.mxu0 %v805
      %v2506 = vpop.f32.mrf.mxu0
      %v2507 = vadd.f32 %v2464, %v2506
      %v2508 = vpop.f32.mrf.mxu0
      %v2509 = vadd.f32 %v2466, %v2508
      %v2510 = vpop.f32.mrf.mxu0
      %v2511 = vadd.f32 %v2468, %v2510
      %v2512 = vpop.f32.mrf.mxu0
      %v2513 = vadd.f32 %v2470, %v2512
      %2514 = vdwg.mxu0
      %2515 = vmatprep.subr.bf16.mxu0 %v1892
      %2516 = vmatpush1.bf16.msra.mxu0 %v1891
      %2517 = vmatprep.subr.bf16.mxu0 %v1884
      %2518 = vmatpush1.bf16.msra.mxu0 %v1883
      %2519 = vmatprep.subr.bf16.mxu0 %v1876
      %2520 = vmatpush1.bf16.msra.mxu0 %v1875
      %2521 = vmatprep.subr.bf16.mxu0 %v1868
      %2522 = vmatpush1.bf16.msra.mxu0 %v1867
      %2523 = vmatprep.subr.bf16.mxu0 %v1860
      %2524 = vmatpush1.bf16.msra.mxu0 %v1859
      %2525 = vmatprep.subr.bf16.mxu0 %v1852
      %2526 = vmatpush1.bf16.msra.mxu0 %v1851
      %2527 = vmatprep.subr.bf16.mxu0 %v1844
      %2528 = vmatpush1.bf16.msra.mxu0 %v1843
      %2529 = vmatprep.subr.bf16.mxu0 %v1836
      %2530 = vmatpush1.bf16.msra.mxu0 %v1835
      %2531 = vmatprep.subr.bf16.mxu0 %v1956
      %2532 = vmatpush2.bf16.msra.mxu0 %v1955
      %2533 = vmatprep.subr.bf16.mxu0 %v1948
      %2534 = vmatpush2.bf16.msra.mxu0 %v1947
      %2535 = vmatprep.subr.bf16.mxu0 %v1940
      %2536 = vmatpush2.bf16.msra.mxu0 %v1939
      %2537 = vmatprep.subr.bf16.mxu0 %v1932
      %2538 = vmatpush2.bf16.msra.mxu0 %v1931
      %2539 = vmatprep.subr.bf16.mxu0 %v1924
      %2540 = vmatpush2.bf16.msra.mxu0 %v1923
      %2541 = vmatprep.subr.bf16.mxu0 %v1916
      %2542 = vmatpush2.bf16.msra.mxu0 %v1915
      %2543 = vmatprep.subr.bf16.mxu0 %v1908
      %2544 = vmatpush2.bf16.msra.mxu0 %v1907
      %2545 = vmatprep.subr.bf16.mxu0 %v1900
      %2546 = vmatpush2.bf16.msra.mxu0 %v1899
      %2547 = vmatprep.mubr.bf16.mxu0 %v804
      %2548 = vmatmul.mubr.bf16.gmra.mxu0 %v803
      %v2549 = vpop.f32.mrf.mxu0
      %v2550 = vadd.f32 0.0, %v2549
      %v2551 = vpop.f32.mrf.mxu0
      %v2552 = vadd.f32 0.0, %v2551
      %v2553 = vpop.f32.mrf.mxu0
      %v2554 = vadd.f32 0.0, %v2553
      %v2555 = vpop.f32.mrf.mxu0
      %v2556 = vadd.f32 0.0, %v2555
      %2557 = vdwg.mxu0
      %2558 = vmatprep.subr.bf16.mxu0 %v2020
      %2559 = vmatpush1.bf16.msra.mxu0 %v2019
      %2560 = vmatprep.subr.bf16.mxu0 %v2012
      %2561 = vmatpush1.bf16.msra.mxu0 %v2011
      %2562 = vmatprep.subr.bf16.mxu0 %v2004
      %2563 = vmatpush1.bf16.msra.mxu0 %v2003
      %2564 = vmatprep.subr.bf16.mxu0 %v1996
      %2565 = vmatpush1.bf16.msra.mxu0 %v1995
      %2566 = vmatprep.subr.bf16.mxu0 %v1988
      %2567 = vmatpush1.bf16.msra.mxu0 %v1987
      %2568 = vmatprep.subr.bf16.mxu0 %v1980
      %2569 = vmatpush1.bf16.msra.mxu0 %v1979
      %2570 = vmatprep.subr.bf16.mxu0 %v1972
      %2571 = vmatpush1.bf16.msra.mxu0 %v1971
      %2572 = vmatprep.subr.bf16.mxu0 %v1964
      %2573 = vmatpush1.bf16.msra.mxu0 %v1963
      %2574 = vmatprep.subr.bf16.mxu0 %v2084
      %2575 = vmatpush2.bf16.msra.mxu0 %v2083
      %2576 = vmatprep.subr.bf16.mxu0 %v2076
      %2577 = vmatpush2.bf16.msra.mxu0 %v2075
      %2578 = vmatprep.subr.bf16.mxu0 %v2068
      %2579 = vmatpush2.bf16.msra.mxu0 %v2067
      %2580 = vmatprep.subr.bf16.mxu0 %v2060
      %2581 = vmatpush2.bf16.msra.mxu0 %v2059
      %2582 = vmatprep.subr.bf16.mxu0 %v2052
      %2583 = vmatpush2.bf16.msra.mxu0 %v2051
      %2584 = vmatprep.subr.bf16.mxu0 %v2044
      %2585 = vmatpush2.bf16.msra.mxu0 %v2043
      %2586 = vmatprep.subr.bf16.mxu0 %v2036
      %2587 = vmatpush2.bf16.msra.mxu0 %v2035
      %2588 = vmatprep.subr.bf16.mxu0 %v2028
      %2589 = vmatpush2.bf16.msra.mxu0 %v2027
      %2590 = vmatprep.mubr.bf16.mxu0 %v806
      %2591 = vmatmul.mubr.bf16.gmra.mxu0 %v805
      %v2592 = vpop.f32.mrf.mxu0
      %v2593 = vadd.f32 %v2550, %v2592
      %v2594 = vpop.f32.mrf.mxu0
      %v2595 = vadd.f32 %v2552, %v2594
      %v2596 = vpop.f32.mrf.mxu0
      %v2597 = vadd.f32 %v2554, %v2596
      %v2598 = vpop.f32.mrf.mxu0
      %v2599 = vadd.f32 %v2556, %v2598
      %2600 = vdwg.mxu0
      %2601 = vmatprep.subr.bf16.mxu0 %v1894
      %2602 = vmatpush1.bf16.msra.mxu0 %v1893
      %2603 = vmatprep.subr.bf16.mxu0 %v1886
      %2604 = vmatpush1.bf16.msra.mxu0 %v1885
      %2605 = vmatprep.subr.bf16.mxu0 %v1878
      %2606 = vmatpush1.bf16.msra.mxu0 %v1877
      %2607 = vmatprep.subr.bf16.mxu0 %v1870
      %2608 = vmatpush1.bf16.msra.mxu0 %v1869
      %2609 = vmatprep.subr.bf16.mxu0 %v1862
      %2610 = vmatpush1.bf16.msra.mxu0 %v1861
      %2611 = vmatprep.subr.bf16.mxu0 %v1854
      %2612 = vmatpush1.bf16.msra.mxu0 %v1853
      %2613 = vmatprep.subr.bf16.mxu0 %v1846
      %2614 = vmatpush1.bf16.msra.mxu0 %v1845
      %2615 = vmatprep.subr.bf16.mxu0 %v1838
      %2616 = vmatpush1.bf16.msra.mxu0 %v1837
      %2617 = vmatprep.subr.bf16.mxu0 %v1958
      %2618 = vmatpush2.bf16.msra.mxu0 %v1957
      %2619 = vmatprep.subr.bf16.mxu0 %v1950
      %2620 = vmatpush2.bf16.msra.mxu0 %v1949
      %2621 = vmatprep.subr.bf16.mxu0 %v1942
      %2622 = vmatpush2.bf16.msra.mxu0 %v1941
      %2623 = vmatprep.subr.bf16.mxu0 %v1934
      %2624 = vmatpush2.bf16.msra.mxu0 %v1933
      %2625 = vmatprep.subr.bf16.mxu0 %v1926
      %2626 = vmatpush2.bf16.msra.mxu0 %v1925
      %2627 = vmatprep.subr.bf16.mxu0 %v1918
      %2628 = vmatpush2.bf16.msra.mxu0 %v1917
      %2629 = vmatprep.subr.bf16.mxu0 %v1910
      %2630 = vmatpush2.bf16.msra.mxu0 %v1909
      %2631 = vmatprep.subr.bf16.mxu0 %v1902
      %2632 = vmatpush2.bf16.msra.mxu0 %v1901
      %2633 = vmatprep.mubr.bf16.mxu0 %v804
      %2634 = vmatmul.mubr.bf16.gmra.mxu0 %v803
      %v2635 = vpop.f32.mrf.mxu0
      %v2636 = vadd.f32 0.0, %v2635
      %v2637 = vpop.f32.mrf.mxu0
      %v2638 = vadd.f32 0.0, %v2637
      %v2639 = vpop.f32.mrf.mxu0
      %v2640 = vadd.f32 0.0, %v2639
      %v2641 = vpop.f32.mrf.mxu0
      %v2642 = vadd.f32 0.0, %v2641
      %2643 = vdwg.mxu0
      %2644 = vmatprep.subr.bf16.mxu0 %v2022
      %2645 = vmatpush1.bf16.msra.mxu0 %v2021
      %2646 = vmatprep.subr.bf16.mxu0 %v2014
      %2647 = vmatpush1.bf16.msra.mxu0 %v2013
      %2648 = vmatprep.subr.bf16.mxu0 %v2006
      %2649 = vmatpush1.bf16.msra.mxu0 %v2005
      %2650 = vmatprep.subr.bf16.mxu0 %v1998
      %2651 = vmatpush1.bf16.msra.mxu0 %v1997
      %2652 = vmatprep.subr.bf16.mxu0 %v1990
      %2653 = vmatpush1.bf16.msra.mxu0 %v1989
      %2654 = vmatprep.subr.bf16.mxu0 %v1982
      %2655 = vmatpush1.bf16.msra.mxu0 %v1981
      %2656 = vmatprep.subr.bf16.mxu0 %v1974
      %2657 = vmatpush1.bf16.msra.mxu0 %v1973
      %2658 = vmatprep.subr.bf16.mxu0 %v1966
      %2659 = vmatpush1.bf16.msra.mxu0 %v1965
      %2660 = vmatprep.subr.bf16.mxu0 %v2086
      %2661 = vmatpush2.bf16.msra.mxu0 %v2085
      %2662 = vmatprep.subr.bf16.mxu0 %v2078
      %2663 = vmatpush2.bf16.msra.mxu0 %v2077
      %2664 = vmatprep.subr.bf16.mxu0 %v2070
      %2665 = vmatpush2.bf16.msra.mxu0 %v2069
      %2666 = vmatprep.subr.bf16.mxu0 %v2062
      %2667 = vmatpush2.bf16.msra.mxu0 %v2061
      %2668 = vmatprep.subr.bf16.mxu0 %v2054
      %2669 = vmatpush2.bf16.msra.mxu0 %v2053
      %2670 = vmatprep.subr.bf16.mxu0 %v2046
      %2671 = vmatpush2.bf16.msra.mxu0 %v2045
      %2672 = vmatprep.subr.bf16.mxu0 %v2038
      %2673 = vmatpush2.bf16.msra.mxu0 %v2037
      %2674 = vmatprep.subr.bf16.mxu0 %v2030
      %2675 = vmatpush2.bf16.msra.mxu0 %v2029
      %2676 = vmatprep.mubr.bf16.mxu0 %v806
      %2677 = vmatmul.mubr.bf16.gmra.mxu0 %v805
      %v2678 = vpop.f32.mrf.mxu0
      %v2679 = vadd.f32 %v2636, %v2678
      %v2680 = vpop.f32.mrf.mxu0
      %v2681 = vadd.f32 %v2638, %v2680
      %v2682 = vpop.f32.mrf.mxu0
      %v2683 = vadd.f32 %v2640, %v2682
      %v2684 = vpop.f32.mrf.mxu0
      %v2685 = vadd.f32 %v2642, %v2684
      %2686 = vdwg.mxu0
      %v2687 = vpack.c.bf16 %v2425, %v2421
      %v2688 = vpack.c.bf16 %v2427, %v2423
      %v2689 = vpack.c.bf16 %v2511, %v2507
      %v2690 = vpack.c.bf16 %v2513, %v2509
      %v2691 = vpack.c.bf16 %v2597, %v2593
      %v2692 = vpack.c.bf16 %v2599, %v2595
      %v2693 = vpack.c.bf16 %v2683, %v2679
      %v2694 = vpack.c.bf16 %v2685, %v2681
      %v2695 = vld [vmem:[%s6] sm:$0xff]
      %v2697 = vcombine.high %v2695, %v2695
      %v2699 = vunpack.c.l.s4 1966171168
      %v2700 = vunpack.c.0.s8 %v2699
      %v2701 = vlaneseq
      %v2702 = vshrl.u32 %v2701, 7
      %v2703 = vsub.s32 %v2700, %v2702
      %v2704 = vrot.slane %v2695, %v2703
      %v2706 = vunpack.c.l.s4 1966171168
      %v2707 = vunpack.c.0.s8 %v2706
      %v2708 = vlaneseq
      %v2709 = vshrl.u32 %v2708, 7
      %v2710 = vsub.s32 %v2707, %v2709
      %v2711 = vrot.slane %v2697, %v2710
      %v2712 = vcombine.high %v2704, %v2704
      %v2713 = vcombine.high %v2711, %v2711
      %v2715 = vunpack.c.l.s4 1966171168
      %v2716 = vunpack.c.0.s8 %v2715
      %v2717 = vlaneseq
      %v2718 = vshrl.u32 %v2717, 7
      %v2719 = vsub.s32 %v2716, %v2718
      %v2720 = vrot.slane %v2704, %v2719
      %v2722 = vunpack.c.l.s4 1966171168
      %v2723 = vunpack.c.0.s8 %v2722
      %v2724 = vlaneseq
      %v2725 = vshrl.u32 %v2724, 7
      %v2726 = vsub.s32 %v2723, %v2725
      %v2727 = vrot.slane %v2711, %v2726
      %v2729 = vunpack.c.l.s4 1966171168
      %v2730 = vunpack.c.0.s8 %v2729
      %v2731 = vlaneseq
      %v2732 = vshrl.u32 %v2731, 7
      %v2733 = vsub.s32 %v2730, %v2732
      %v2734 = vrot.slane %v2712, %v2733
      %v2736 = vunpack.c.l.s4 1966171168
      %v2737 = vunpack.c.0.s8 %v2736
      %v2738 = vlaneseq
      %v2739 = vshrl.u32 %v2738, 7
      %v2740 = vsub.s32 %v2737, %v2739
      %v2741 = vrot.slane %v2713, %v2740
      %v2742 = vcombine.high %v2720, %v2720
      %v2743 = vcombine.high %v2727, %v2727
      %v2744 = vcombine.high %v2734, %v2734
      %v2745 = vcombine.high %v2741, %v2741
      %v2747 = vpack.i.b16 %v2720, %v2720
      %v2749 = vlaneseq
      %v2750 = vshrl.u32 %v2749, 7
      %v2751 = vsub.s32 0, %v2750
      %v2752 = vrot.slane %v2747, %v2751
      %v2754 = vpack.i.b16 %v2734, %v2734
      %v2756 = vlaneseq
      %v2757 = vshrl.u32 %v2756, 7
      %v2758 = vsub.s32 0, %v2757
      %v2759 = vrot.slane %v2754, %v2758
      %v2761 = vpack.i.b16 %v2742, %v2742
      %v2763 = vlaneseq
      %v2764 = vshrl.u32 %v2763, 7
      %v2765 = vsub.s32 0, %v2764
      %v2766 = vrot.slane %v2761, %v2765
      %v2768 = vpack.i.b16 %v2744, %v2744
      %v2770 = vlaneseq
      %v2771 = vshrl.u32 %v2770, 7
      %v2772 = vsub.s32 0, %v2771
      %v2773 = vrot.slane %v2768, %v2772
      %v2775 = vpack.i.b16 %v2727, %v2727
      %v2777 = vlaneseq
      %v2778 = vshrl.u32 %v2777, 7
      %v2779 = vsub.s32 0, %v2778
      %v2780 = vrot.slane %v2775, %v2779
      %v2782 = vpack.i.b16 %v2741, %v2741
      %v2784 = vlaneseq
      %v2785 = vshrl.u32 %v2784, 7
      %v2786 = vsub.s32 0, %v2785
      %v2787 = vrot.slane %v2782, %v2786
      %v2789 = vpack.i.b16 %v2743, %v2743
      %v2791 = vlaneseq
      %v2792 = vshrl.u32 %v2791, 7
      %v2793 = vsub.s32 0, %v2792
      %v2794 = vrot.slane %v2789, %v2793
      %v2796 = vpack.i.b16 %v2745, %v2745
      %v2798 = vlaneseq
      %v2799 = vshrl.u32 %v2798, 7
      %v2800 = vsub.s32 0, %v2799
      %v2801 = vrot.slane %v2796, %v2800
      %v2802 = vadd.bf16 %v2687, %v2752
      %v2803 = vadd.bf16 %v2688, %v2759
      %v2804 = vadd.bf16 %v2689, %v2766
      %v2805 = vadd.bf16 %v2690, %v2773
      %v2806 = vadd.bf16 %v2691, %v2780
      %v2807 = vadd.bf16 %v2692, %v2787
      %v2808 = vadd.bf16 %v2693, %v2794
      %v2809 = vadd.bf16 %v2694, %v2801
      %v2810 = vmul.bf16 %v2802, 1045249613
      %v2811 = vmul.bf16 %v2803, 1045249613
      %v2812 = vmul.bf16 %v2804, 1045249613
      %v2813 = vmul.bf16 %v2805, 1045249613
      %v2814 = vmul.bf16 %v2806, 1045249613
      %v2815 = vmul.bf16 %v2807, 1045249613
      %v2816 = vmul.bf16 %v2808, 1045249613
      %v2817 = vmul.bf16 %v2809, 1045249613
      %v2818 = vmax.bf16 %v2802, %v2810
      %v2819 = vmax.bf16 %v2803, %v2811
      %v2820 = vmax.bf16 %v2804, %v2812
      %v2821 = vmax.bf16 %v2805, %v2813
      %v2822 = vmax.bf16 %v2806, %v2814
      %v2823 = vmax.bf16 %v2807, %v2815
      %v2824 = vmax.bf16 %v2808, %v2816
      %v2825 = vmax.bf16 %v2809, %v2817
      %v2834 = vunpack.c.l.b16 %v2818
      %v2835 = vunpack.c.l.b16 %v2819
      %v2836 = vunpack.c.l.b16 %v2820
      %v2837 = vunpack.c.l.b16 %v2821
      %v2838 = vunpack.c.l.b16 %v2822
      %v2839 = vunpack.c.l.b16 %v2823
      %v2840 = vunpack.c.l.b16 %v2824
      %v2841 = vunpack.c.l.b16 %v2825
      %v2842 = vunpack.c.h.b16 %v2818
      %v2843 = vunpack.c.h.b16 %v2819
      %v2844 = vunpack.c.h.b16 %v2820
      %v2845 = vunpack.c.h.b16 %v2821
      %v2846 = vunpack.c.h.b16 %v2822
      %v2847 = vunpack.c.h.b16 %v2823
      %v2848 = vunpack.c.h.b16 %v2824
      %v2849 = vunpack.c.h.b16 %v2825
      %v2850 = vpack.c.b16 %v2835, %v2834
      %v2851 = vpack.c.b16 %v2837, %v2836
      %v2852 = vpack.c.b16 %v2839, %v2838
      %v2853 = vpack.c.b16 %v2841, %v2840
      %v2854 = vpack.c.b16 %v2843, %v2842
      %v2855 = vpack.c.b16 %v2845, %v2844
      %v2856 = vpack.c.b16 %v2847, %v2846
      %v2857 = vpack.c.b16 %v2849, %v2848
      %2866 = vst [vmem:[#allocation2] sm:$0xff] %v2850
      %2867 = vst [vmem:[#allocation2 + $0x8] sm:$0xff] %v2851
      %2868 = vst [vmem:[#allocation2 + $0x10] sm:$0xff] %v2852
      %2869 = vst [vmem:[#allocation2 + $0x18] sm:$0xff] %v2853
      %2870 = vst [vmem:[#allocation2 + $0x20] sm:$0xff] %v2854
      %2871 = vst [vmem:[#allocation2 + $0x28] sm:$0xff] %v2855
      %2872 = vst [vmem:[#allocation2 + $0x30] sm:$0xff] %v2856
      %2873 = vst [vmem:[#allocation2 + $0x38] sm:$0xff] %v2857
    $region65: #{tpu_custom_call.1} parent=1 // pred_fallthru
      _
    %v2874 = vld [vmem:[#allocation2] sm:$0xff]
    %v2875 = vld [vmem:[#allocation2 + $0x8] sm:$0xff]
    %v2876 = vld [vmem:[#allocation2 + $0x10] sm:$0xff]
    %v2877 = vld [vmem:[#allocation2 + $0x18] sm:$0xff]
    %v2878 = vld [vmem:[#allocation2 + $0x20] sm:$0xff]
    %v2879 = vld [vmem:[#allocation2 + $0x28] sm:$0xff]
    %v2880 = vld [vmem:[#allocation2 + $0x30] sm:$0xff]
    %v2881 = vld [vmem:[#allocation2 + $0x38] sm:$0xff]
    %v2882 = vld [vmem:[#allocation12] sm:$0xf]
    %v2883 = vld [vmem:[#allocation12 + $0x4] sm:$0xf]
    %v2884 = vld [vmem:[#allocation12 + $0x8] sm:$0xf]
    %v2885 = vld [vmem:[#allocation12 + $0xc] sm:$0xf]
    %v2886 = vld [vmem:[#allocation12 + $0x10] sm:$0xf]
    %v2887 = vld [vmem:[#allocation12 + $0x14] sm:$0xf]
    %v2888 = vld [vmem:[#allocation12 + $0x18] sm:$0xf]
    %v2889 = vld [vmem:[#allocation12 + $0x1c] sm:$0xf]
    %v2890 = vld [vmem:[#allocation12 + $0x20] sm:$0xf]
    %v2891 = vld [vmem:[#allocation12 + $0x24] sm:$0xf]
    %v2892 = vld [vmem:[#allocation12 + $0x28] sm:$0xf]
    %v2893 = vld [vmem:[#allocation12 + $0x2c] sm:$0xf]
    %v2894 = vld [vmem:[#allocation12 + $0x30] sm:$0xf]
    %v2895 = vld [vmem:[#allocation12 + $0x34] sm:$0xf]
    %v2896 = vld [vmem:[#allocation12 + $0x38] sm:$0xf]
    %v2897 = vld [vmem:[#allocation12 + $0x3c] sm:$0xf]
    %v2898 = vld [vmem:[#allocation12 + $0x40] sm:$0xf]
    %v2899 = vld [vmem:[#allocation12 + $0x44] sm:$0xf]
    %v2900 = vld [vmem:[#allocation12 + $0x48] sm:$0xf]
    %v2901 = vld [vmem:[#allocation12 + $0x4c] sm:$0xf]
    %v2902 = vld [vmem:[#allocation12 + $0x50] sm:$0xf]
    %v2903 = vld [vmem:[#allocation12 + $0x54] sm:$0xf]
    %v2904 = vld [vmem:[#allocation12 + $0x58] sm:$0xf]
    %v2905 = vld [vmem:[#allocation12 + $0x5c] sm:$0xf]
    %v2906 = vld [vmem:[#allocation12 + $0x60] sm:$0xf]
    %v2907 = vld [vmem:[#allocation12 + $0x64] sm:$0xf]
    %v2908 = vld [vmem:[#allocation12 + $0x68] sm:$0xf]
    %v2909 = vld [vmem:[#allocation12 + $0x6c] sm:$0xf]
    %v2910 = vld [vmem:[#allocation12 + $0x70] sm:$0xf]
    %v2911 = vld [vmem:[#allocation12 + $0x74] sm:$0xf]
    %v2912 = vld [vmem:[#allocation12 + $0x78] sm:$0xf]
    %v2913 = vld [vmem:[#allocation12 + $0x7c] sm:$0xf]
    %v2914 = vld [vmem:[#allocation12 + $0x80] sm:$0xf]
    %v2915 = vld [vmem:[#allocation12 + $0x84] sm:$0xf]
    %v2916 = vld [vmem:[#allocation12 + $0x88] sm:$0xf]
    %v2917 = vld [vmem:[#allocation12 + $0x8c] sm:$0xf]
    %v2918 = vld [vmem:[#allocation12 + $0x90] sm:$0xf]
    %v2919 = vld [vmem:[#allocation12 + $0x94] sm:$0xf]
    %v2920 = vld [vmem:[#allocation12 + $0x98] sm:$0xf]
    %v2921 = vld [vmem:[#allocation12 + $0x9c] sm:$0xf]
    %v2922 = vld [vmem:[#allocation12 + $0xa0] sm:$0xf]
    %v2923 = vld [vmem:[#allocation12 + $0xa4] sm:$0xf]
    %v2924 = vld [vmem:[#allocation12 + $0xa8] sm:$0xf]
    %v2925 = vld [vmem:[#allocation12 + $0xac] sm:$0xf]
    %v2926 = vld [vmem:[#allocation12 + $0xb0] sm:$0xf]
    %v2927 = vld [vmem:[#allocation12 + $0xb4] sm:$0xf]
    %v2928 = vld [vmem:[#allocation12 + $0xb8] sm:$0xf]
    %v2929 = vld [vmem:[#allocation12 + $0xbc] sm:$0xf]
    %v2930 = vld [vmem:[#allocation12 + $0xc0] sm:$0xf]
    %v2931 = vld [vmem:[#allocation12 + $0xc4] sm:$0xf]
    %v2932 = vld [vmem:[#allocation12 + $0xc8] sm:$0xf]
    %v2933 = vld [vmem:[#allocation12 + $0xcc] sm:$0xf]
    %v2934 = vld [vmem:[#allocation12 + $0xd0] sm:$0xf]
    %v2935 = vld [vmem:[#allocation12 + $0xd4] sm:$0xf]
    %v2936 = vld [vmem:[#allocation12 + $0xd8] sm:$0xf]
    %v2937 = vld [vmem:[#allocation12 + $0xdc] sm:$0xf]
    %v2938 = vld [vmem:[#allocation12 + $0xe0] sm:$0xf]
    %v2939 = vld [vmem:[#allocation12 + $0xe4] sm:$0xf]
    %v2940 = vld [vmem:[#allocation12 + $0xe8] sm:$0xf]
    %v2941 = vld [vmem:[#allocation12 + $0xec] sm:$0xf]
    %v2942 = vld [vmem:[#allocation12 + $0xf0] sm:$0xf]
    %v2943 = vld [vmem:[#allocation12 + $0xf4] sm:$0xf]
    %v2944 = vld [vmem:[#allocation12 + $0xf8] sm:$0xf]
    %v2945 = vld [vmem:[#allocation12 + $0xfc] sm:$0xf]
    %v2946 = vld [vmem:[#allocation12 + $0x100] sm:$0xf]
    %v2947 = vld [vmem:[#allocation12 + $0x104] sm:$0xf]
    %v2948 = vld [vmem:[#allocation12 + $0x108] sm:$0xf]
    %v2949 = vld [vmem:[#allocation12 + $0x10c] sm:$0xf]
    %v2950 = vld [vmem:[#allocation12 + $0x110] sm:$0xf]
    %v2951 = vld [vmem:[#allocation12 + $0x114] sm:$0xf]
    %v2952 = vld [vmem:[#allocation12 + $0x118] sm:$0xf]
    %v2953 = vld [vmem:[#allocation12 + $0x11c] sm:$0xf]
    %v2954 = vld [vmem:[#allocation12 + $0x120] sm:$0xf]
    %v2955 = vld [vmem:[#allocation12 + $0x124] sm:$0xf]
    %v2956 = vld [vmem:[#allocation12 + $0x128] sm:$0xf]
    %v2957 = vld [vmem:[#allocation12 + $0x12c] sm:$0xf]
    %v2958 = vld [vmem:[#allocation12 + $0x130] sm:$0xf]
    %v2959 = vld [vmem:[#allocation12 + $0x134] sm:$0xf]
    %v2960 = vld [vmem:[#allocation12 + $0x138] sm:$0xf]
    %v2961 = vld [vmem:[#allocation12 + $0x13c] sm:$0xf]
    %v2962 = vld [vmem:[#allocation12 + $0x140] sm:$0xf]
    %v2963 = vld [vmem:[#allocation12 + $0x144] sm:$0xf]
    %v2964 = vld [vmem:[#allocation12 + $0x148] sm:$0xf]
    %v2965 = vld [vmem:[#allocation12 + $0x14c] sm:$0xf]
    %v2966 = vld [vmem:[#allocation12 + $0x150] sm:$0xf]
    %v2967 = vld [vmem:[#allocation12 + $0x154] sm:$0xf]
    %v2968 = vld [vmem:[#allocation12 + $0x158] sm:$0xf]
    %v2969 = vld [vmem:[#allocation12 + $0x15c] sm:$0xf]
    %v2970 = vld [vmem:[#allocation12 + $0x160] sm:$0xf]
    %v2971 = vld [vmem:[#allocation12 + $0x164] sm:$0xf]
    %v2972 = vld [vmem:[#allocation12 + $0x168] sm:$0xf]
    %v2973 = vld [vmem:[#allocation12 + $0x16c] sm:$0xf]
    %v2974 = vld [vmem:[#allocation12 + $0x170] sm:$0xf]
    %v2975 = vld [vmem:[#allocation12 + $0x174] sm:$0xf]
    %v2976 = vld [vmem:[#allocation12 + $0x178] sm:$0xf]
    %v2977 = vld [vmem:[#allocation12 + $0x17c] sm:$0xf]
    %v2978 = vld [vmem:[#allocation12 + $0x180] sm:$0xf]
    %v2979 = vld [vmem:[#allocation12 + $0x184] sm:$0xf]
    %v2980 = vld [vmem:[#allocation12 + $0x188] sm:$0xf]
    %v2981 = vld [vmem:[#allocation12 + $0x18c] sm:$0xf]
    %v2982 = vld [vmem:[#allocation12 + $0x190] sm:$0xf]
    %v2983 = vld [vmem:[#allocation12 + $0x194] sm:$0xf]
    %v2984 = vld [vmem:[#allocation12 + $0x198] sm:$0xf]
    %v2985 = vld [vmem:[#allocation12 + $0x19c] sm:$0xf]
    %v2986 = vld [vmem:[#allocation12 + $0x1a0] sm:$0xf]
    %v2987 = vld [vmem:[#allocation12 + $0x1a4] sm:$0xf]
    %v2988 = vld [vmem:[#allocation12 + $0x1a8] sm:$0xf]
    %v2989 = vld [vmem:[#allocation12 + $0x1ac] sm:$0xf]
    %v2990 = vld [vmem:[#allocation12 + $0x1b0] sm:$0xf]
    %v2991 = vld [vmem:[#allocation12 + $0x1b4] sm:$0xf]
    %v2992 = vld [vmem:[#allocation12 + $0x1b8] sm:$0xf]
    %v2993 = vld [vmem:[#allocation12 + $0x1bc] sm:$0xf]
    %v2994 = vld [vmem:[#allocation12 + $0x1c0] sm:$0xf]
    %v2995 = vld [vmem:[#allocation12 + $0x1c4] sm:$0xf]
    %v2996 = vld [vmem:[#allocation12 + $0x1c8] sm:$0xf]
    %v2997 = vld [vmem:[#allocation12 + $0x1cc] sm:$0xf]
    %v2998 = vld [vmem:[#allocation12 + $0x1d0] sm:$0xf]
    %v2999 = vld [vmem:[#allocation12 + $0x1d4] sm:$0xf]
    %v3000 = vld [vmem:[#allocation12 + $0x1d8] sm:$0xf]
    %v3001 = vld [vmem:[#allocation12 + $0x1dc] sm:$0xf]
    %v3002 = vld [vmem:[#allocation12 + $0x1e0] sm:$0xf]
    %v3003 = vld [vmem:[#allocation12 + $0x1e4] sm:$0xf]
    %v3004 = vld [vmem:[#allocation12 + $0x1e8] sm:$0xf]
    %v3005 = vld [vmem:[#allocation12 + $0x1ec] sm:$0xf]
    %v3006 = vld [vmem:[#allocation12 + $0x1f0] sm:$0xf]
    %v3007 = vld [vmem:[#allocation12 + $0x1f4] sm:$0xf]
    %v3008 = vld [vmem:[#allocation12 + $0x1f8] sm:$0xf]
    %v3009 = vld [vmem:[#allocation12 + $0x1fc] sm:$0xf]
    %v3010 = vld [vmem:[%s8] sm:$0x1]
    %v3012 = vlaneseq
    %v3013 = vshrl.u32 %v3012, 7
    %v3014 = vsub.s32 0, %v3013
    %v3015 = vrot.slane %v3010, %v3014
    %v3025 = vunpack.c.l.b16 %v2874
    %v3026 = vunpack.c.h.b16 %v2874
    %v3027 = vunpack.c.l.b16 %v2875
    %v3028 = vunpack.c.h.b16 %v2875
    %v3029 = vunpack.c.l.b16 %v2876
    %v3030 = vunpack.c.h.b16 %v2876
    %v3031 = vunpack.c.l.b16 %v2877
    %v3032 = vunpack.c.h.b16 %v2877
    %v3033 = vunpack.c.l.b16 %v2878
    %v3034 = vunpack.c.h.b16 %v2878
    %v3035 = vunpack.c.l.b16 %v2879
    %v3036 = vunpack.c.h.b16 %v2879
    %v3037 = vunpack.c.l.b16 %v2880
    %v3038 = vunpack.c.h.b16 %v2880
    %v3039 = vunpack.c.l.b16 %v2881
    %v3040 = vunpack.c.h.b16 %v2881
    %v3041 = vpack.c.b16 %v3033, %v3025
    %v3042 = vpack.c.b16 %v3034, %v3026
    %v3043 = vpack.c.b16 %v3035, %v3027
    %v3044 = vpack.c.b16 %v3036, %v3028
    %v3045 = vpack.c.b16 %v3037, %v3029
    %v3046 = vpack.c.b16 %v3038, %v3030
    %v3047 = vpack.c.b16 %v3039, %v3031
    %v3048 = vpack.c.b16 %v3040, %v3032
    %v3185 = vunpack.c.l.b16 %v2882
    %v3186 = vunpack.c.l.b16 %v2883
    %v3187 = vunpack.c.l.b16 %v2884
    %v3188 = vunpack.c.l.b16 %v2885
    %v3189 = vunpack.c.l.b16 %v2886
    %v3190 = vunpack.c.l.b16 %v2887
    %v3191 = vunpack.c.l.b16 %v2888
    %v3192 = vunpack.c.l.b16 %v2889
    %v3193 = vunpack.c.l.b16 %v2890
    %v3194 = vunpack.c.l.b16 %v2891
    %v3195 = vunpack.c.l.b16 %v2892
    %v3196 = vunpack.c.l.b16 %v2893
    %v3197 = vunpack.c.l.b16 %v2894
    %v3198 = vunpack.c.l.b16 %v2895
    %v3199 = vunpack.c.l.b16 %v2896
    %v3200 = vunpack.c.l.b16 %v2897
    %v3201 = vunpack.c.l.b16 %v2898
    %v3202 = vunpack.c.l.b16 %v2899
    %v3203 = vunpack.c.l.b16 %v2900
    %v3204 = vunpack.c.l.b16 %v2901
    %v3205 = vunpack.c.l.b16 %v2902
    %v3206 = vunpack.c.l.b16 %v2903
    %v3207 = vunpack.c.l.b16 %v2904
    %v3208 = vunpack.c.l.b16 %v2905
    %v3209 = vunpack.c.l.b16 %v2906
    %v3210 = vunpack.c.l.b16 %v2907
    %v3211 = vunpack.c.l.b16 %v2908
    %v3212 = vunpack.c.l.b16 %v2909
    %v3213 = vunpack.c.l.b16 %v2910
    %v3214 = vunpack.c.l.b16 %v2911
    %v3215 = vunpack.c.l.b16 %v2912
    %v3216 = vunpack.c.l.b16 %v2913
    %v3217 = vunpack.c.l.b16 %v2914
    %v3218 = vunpack.c.l.b16 %v2915
    %v3219 = vunpack.c.l.b16 %v2916
    %v3220 = vunpack.c.l.b16 %v2917
    %v3221 = vunpack.c.l.b16 %v2918
    %v3222 = vunpack.c.l.b16 %v2919
    %v3223 = vunpack.c.l.b16 %v2920
    %v3224 = vunpack.c.l.b16 %v2921
    %v3225 = vunpack.c.l.b16 %v2922
    %v3226 = vunpack.c.l.b16 %v2923
    %v3227 = vunpack.c.l.b16 %v2924
    %v3228 = vunpack.c.l.b16 %v2925
    %v3229 = vunpack.c.l.b16 %v2926
    %v3230 = vunpack.c.l.b16 %v2927
    %v3231 = vunpack.c.l.b16 %v2928
    %v3232 = vunpack.c.l.b16 %v2929
    %v3233 = vunpack.c.l.b16 %v2930
    %v3234 = vunpack.c.l.b16 %v2931
    %v3235 = vunpack.c.l.b16 %v2932
    %v3236 = vunpack.c.l.b16 %v2933
    %v3237 = vunpack.c.l.b16 %v2934
    %v3238 = vunpack.c.l.b16 %v2935
    %v3239 = vunpack.c.l.b16 %v2936
    %v3240 = vunpack.c.l.b16 %v2937
    %v3241 = vunpack.c.l.b16 %v2938
    %v3242 = vunpack.c.l.b16 %v2939
    %v3243 = vunpack.c.l.b16 %v2940
    %v3244 = vunpack.c.l.b16 %v2941
    %v3245 = vunpack.c.l.b16 %v2942
    %v3246 = vunpack.c.l.b16 %v2943
    %v3247 = vunpack.c.l.b16 %v2944
    %v3248 = vunpack.c.l.b16 %v2945
    %v3249 = vunpack.c.l.b16 %v2946
    %v3250 = vunpack.c.l.b16 %v2947
    %v3251 = vunpack.c.l.b16 %v2948
    %v3252 = vunpack.c.l.b16 %v2949
    %v3253 = vunpack.c.l.b16 %v2950
    %v3254 = vunpack.c.l.b16 %v2951
    %v3255 = vunpack.c.l.b16 %v2952
    %v3256 = vunpack.c.l.b16 %v2953
    %v3257 = vunpack.c.l.b16 %v2954
    %v3258 = vunpack.c.l.b16 %v2955
    %v3259 = vunpack.c.l.b16 %v2956
    %v3260 = vunpack.c.l.b16 %v2957
    %v3261 = vunpack.c.l.b16 %v2958
    %v3262 = vunpack.c.l.b16 %v2959
    %v3263 = vunpack.c.l.b16 %v2960
    %v3264 = vunpack.c.l.b16 %v2961
    %v3265 = vunpack.c.l.b16 %v2962
    %v3266 = vunpack.c.l.b16 %v2963
    %v3267 = vunpack.c.l.b16 %v2964
    %v3268 = vunpack.c.l.b16 %v2965
    %v3269 = vunpack.c.l.b16 %v2966
    %v3270 = vunpack.c.l.b16 %v2967
    %v3271 = vunpack.c.l.b16 %v2968
    %v3272 = vunpack.c.l.b16 %v2969
    %v3273 = vunpack.c.l.b16 %v2970
    %v3274 = vunpack.c.l.b16 %v2971
    %v3275 = vunpack.c.l.b16 %v2972
    %v3276 = vunpack.c.l.b16 %v2973
    %v3277 = vunpack.c.l.b16 %v2974
    %v3278 = vunpack.c.l.b16 %v2975
    %v3279 = vunpack.c.l.b16 %v2976
    %v3280 = vunpack.c.l.b16 %v2977
    %v3281 = vunpack.c.l.b16 %v2978
    %v3282 = vunpack.c.l.b16 %v2979
    %v3283 = vunpack.c.l.b16 %v2980
    %v3284 = vunpack.c.l.b16 %v2981
    %v3285 = vunpack.c.l.b16 %v2982
    %v3286 = vunpack.c.l.b16 %v2983
    %v3287 = vunpack.c.l.b16 %v2984
    %v3288 = vunpack.c.l.b16 %v2985
    %v3289 = vunpack.c.l.b16 %v2986
    %v3290 = vunpack.c.l.b16 %v2987
    %v3291 = vunpack.c.l.b16 %v2988
    %v3292 = vunpack.c.l.b16 %v2989
    %v3293 = vunpack.c.l.b16 %v2990
    %v3294 = vunpack.c.l.b16 %v2991
    %v3295 = vunpack.c.l.b16 %v2992
    %v3296 = vunpack.c.l.b16 %v2993
    %v3297 = vunpack.c.l.b16 %v2994
    %v3298 = vunpack.c.l.b16 %v2995
    %v3299 = vunpack.c.l.b16 %v2996
    %v3300 = vunpack.c.l.b16 %v2997
    %v3301 = vunpack.c.l.b16 %v2998
    %v3302 = vunpack.c.l.b16 %v2999
    %v3303 = vunpack.c.l.b16 %v3000
    %v3304 = vunpack.c.l.b16 %v3001
    %v3305 = vunpack.c.l.b16 %v3002
    %v3306 = vunpack.c.l.b16 %v3003
    %v3307 = vunpack.c.l.b16 %v3004
    %v3308 = vunpack.c.l.b16 %v3005
    %v3309 = vunpack.c.l.b16 %v3006
    %v3310 = vunpack.c.l.b16 %v3007
    %v3311 = vunpack.c.l.b16 %v3008
    %v3312 = vunpack.c.l.b16 %v3009
    %v3313 = vpack.c.b16 %v3186, %v3185
    %v3314 = vpack.c.b16 %v3188, %v3187
    %v3315 = vpack.c.b16 %v3190, %v3189
    %v3316 = vpack.c.b16 %v3192, %v3191
    %v3317 = vpack.c.b16 %v3194, %v3193
    %v3318 = vpack.c.b16 %v3196, %v3195
    %v3319 = vpack.c.b16 %v3198, %v3197
    %v3320 = vpack.c.b16 %v3200, %v3199
    %v3321 = vpack.c.b16 %v3202, %v3201
    %v3322 = vpack.c.b16 %v3204, %v3203
    %v3323 = vpack.c.b16 %v3206, %v3205
    %v3324 = vpack.c.b16 %v3208, %v3207
    %v3325 = vpack.c.b16 %v3210, %v3209
    %v3326 = vpack.c.b16 %v3212, %v3211
    %v3327 = vpack.c.b16 %v3214, %v3213
    %v3328 = vpack.c.b16 %v3216, %v3215
    %v3329 = vpack.c.b16 %v3218, %v3217
    %v3330 = vpack.c.b16 %v3220, %v3219
    %v3331 = vpack.c.b16 %v3222, %v3221
    %v3332 = vpack.c.b16 %v3224, %v3223
    %v3333 = vpack.c.b16 %v3226, %v3225
    %v3334 = vpack.c.b16 %v3228, %v3227
    %v3335 = vpack.c.b16 %v3230, %v3229
    %v3336 = vpack.c.b16 %v3232, %v3231
    %v3337 = vpack.c.b16 %v3234, %v3233
    %v3338 = vpack.c.b16 %v3236, %v3235
    %v3339 = vpack.c.b16 %v3238, %v3237
    %v3340 = vpack.c.b16 %v3240, %v3239
    %v3341 = vpack.c.b16 %v3242, %v3241
    %v3342 = vpack.c.b16 %v3244, %v3243
    %v3343 = vpack.c.b16 %v3246, %v3245
    %v3344 = vpack.c.b16 %v3248, %v3247
    %v3345 = vpack.c.b16 %v3250, %v3249
    %v3346 = vpack.c.b16 %v3252, %v3251
    %v3347 = vpack.c.b16 %v3254, %v3253
    %v3348 = vpack.c.b16 %v3256, %v3255
    %v3349 = vpack.c.b16 %v3258, %v3257
    %v3350 = vpack.c.b16 %v3260, %v3259
    %v3351 = vpack.c.b16 %v3262, %v3261
    %v3352 = vpack.c.b16 %v3264, %v3263
    %v3353 = vpack.c.b16 %v3266, %v3265
    %v3354 = vpack.c.b16 %v3268, %v3267
    %v3355 = vpack.c.b16 %v3270, %v3269
    %v3356 = vpack.c.b16 %v3272, %v3271
    %v3357 = vpack.c.b16 %v3274, %v3273
    %v3358 = vpack.c.b16 %v3276, %v3275
    %v3359 = vpack.c.b16 %v3278, %v3277
    %v3360 = vpack.c.b16 %v3280, %v3279
    %v3361 = vpack.c.b16 %v3282, %v3281
    %v3362 = vpack.c.b16 %v3284, %v3283
    %v3363 = vpack.c.b16 %v3286, %v3285
    %v3364 = vpack.c.b16 %v3288, %v3287
    %v3365 = vpack.c.b16 %v3290, %v3289
    %v3366 = vpack.c.b16 %v3292, %v3291
    %v3367 = vpack.c.b16 %v3294, %v3293
    %v3368 = vpack.c.b16 %v3296, %v3295
    %v3369 = vpack.c.b16 %v3298, %v3297
    %v3370 = vpack.c.b16 %v3300, %v3299
    %v3371 = vpack.c.b16 %v3302, %v3301
    %v3372 = vpack.c.b16 %v3304, %v3303
    %v3373 = vpack.c.b16 %v3306, %v3305
    %v3374 = vpack.c.b16 %v3308, %v3307
    %v3375 = vpack.c.b16 %v3310, %v3309
    %v3376 = vpack.c.b16 %v3312, %v3311
    %3441 = vmatprep.subr.bf16.mxu0 0
    %3442 = vmatpush1.bf16.msra.mxu0 %v3320
    %3443 = vmatprep.subr.bf16.mxu0 0
    %3444 = vmatpush1.bf16.msra.mxu0 %v3319
    %3445 = vmatprep.subr.bf16.mxu0 0
    %3446 = vmatpush1.bf16.msra.mxu0 %v3318
    %3447 = vmatprep.subr.bf16.mxu0 0
    %3448 = vmatpush1.bf16.msra.mxu0 %v3317
    %3449 = vmatprep.subr.bf16.mxu0 0
    %3450 = vmatpush1.bf16.msra.mxu0 %v3316
    %3451 = vmatprep.subr.bf16.mxu0 0
    %3452 = vmatpush1.bf16.msra.mxu0 %v3315
    %3453 = vmatprep.subr.bf16.mxu0 0
    %3454 = vmatpush1.bf16.msra.mxu0 %v3314
    %3455 = vmatprep.subr.bf16.mxu0 0
    %3456 = vmatpush1.bf16.msra.mxu0 %v3313
    %3457 = vmatprep.subr.bf16.mxu0 0
    %3458 = vmatpush2.bf16.msra.mxu0 %v3328
    %3459 = vmatprep.subr.bf16.mxu0 0
    %3460 = vmatpush2.bf16.msra.mxu0 %v3327
    %3461 = vmatprep.subr.bf16.mxu0 0
    %3462 = vmatpush2.bf16.msra.mxu0 %v3326
    %3463 = vmatprep.subr.bf16.mxu0 0
    %3464 = vmatpush2.bf16.msra.mxu0 %v3325
    %3465 = vmatprep.subr.bf16.mxu0 0
    %3466 = vmatpush2.bf16.msra.mxu0 %v3324
    %3467 = vmatprep.subr.bf16.mxu0 0
    %3468 = vmatpush2.bf16.msra.mxu0 %v3323
    %3469 = vmatprep.subr.bf16.mxu0 0
    %3470 = vmatpush2.bf16.msra.mxu0 %v3322
    %3471 = vmatprep.subr.bf16.mxu0 0
    %3472 = vmatpush2.bf16.msra.mxu0 %v3321
    %3473 = vmatprep.mubr.bf16.mxu0 %v3042
    %3474 = vmatmul.mubr.bf16.gmra.mxu0 %v3041
    %v3475 = vpop.f32.mrf.mxu0
    %v3476 = vadd.f32 %v3015, %v3475
    %v3477 = vpop.f32.mrf.mxu0
    %v3478 = vpop.f32.mrf.mxu0
    %v3479 = vadd.f32 %v3015, %v3478
    %v3480 = vpop.f32.mrf.mxu0
    %3481 = vdwg.mxu0
    %3482 = vmatprep.subr.bf16.mxu0 0
    %3483 = vmatpush1.bf16.msra.mxu0 %v3336
    %3484 = vmatprep.subr.bf16.mxu0 0
    %3485 = vmatpush1.bf16.msra.mxu0 %v3335
    %3486 = vmatprep.subr.bf16.mxu0 0
    %3487 = vmatpush1.bf16.msra.mxu0 %v3334
    %3488 = vmatprep.subr.bf16.mxu0 0
    %3489 = vmatpush1.bf16.msra.mxu0 %v3333
    %3490 = vmatprep.subr.bf16.mxu0 0
    %3491 = vmatpush1.bf16.msra.mxu0 %v3332
    %3492 = vmatprep.subr.bf16.mxu0 0
    %3493 = vmatpush1.bf16.msra.mxu0 %v3331
    %3494 = vmatprep.subr.bf16.mxu0 0
    %3495 = vmatpush1.bf16.msra.mxu0 %v3330
    %3496 = vmatprep.subr.bf16.mxu0 0
    %3497 = vmatpush1.bf16.msra.mxu0 %v3329
    %3498 = vmatprep.subr.bf16.mxu0 0
    %3499 = vmatpush2.bf16.msra.mxu0 %v3344
    %3500 = vmatprep.subr.bf16.mxu0 0
    %3501 = vmatpush2.bf16.msra.mxu0 %v3343
    %3502 = vmatprep.subr.bf16.mxu0 0
    %3503 = vmatpush2.bf16.msra.mxu0 %v3342
    %3504 = vmatprep.subr.bf16.mxu0 0
    %3505 = vmatpush2.bf16.msra.mxu0 %v3341
    %3506 = vmatprep.subr.bf16.mxu0 0
    %3507 = vmatpush2.bf16.msra.mxu0 %v3340
    %3508 = vmatprep.subr.bf16.mxu0 0
    %3509 = vmatpush2.bf16.msra.mxu0 %v3339
    %3510 = vmatprep.subr.bf16.mxu0 0
    %3511 = vmatpush2.bf16.msra.mxu0 %v3338
    %3512 = vmatprep.subr.bf16.mxu0 0
    %3513 = vmatpush2.bf16.msra.mxu0 %v3337
    %3514 = vmatprep.mubr.bf16.mxu0 %v3044
    %3515 = vmatmul.mubr.bf16.gmra.mxu0 %v3043
    %v3516 = vpop.f32.mrf.mxu0
    %v3517 = vadd.f32 %v3476, %v3516
    %v3518 = vpop.f32.mrf.mxu0
    %v3519 = vpop.f32.mrf.mxu0
    %v3520 = vadd.f32 %v3479, %v3519
    %v3521 = vpop.f32.mrf.mxu0
    %3522 = vdwg.mxu0
    %3523 = vmatprep.subr.bf16.mxu0 0
    %3524 = vmatpush1.bf16.msra.mxu0 %v3352
    %3525 = vmatprep.subr.bf16.mxu0 0
    %3526 = vmatpush1.bf16.msra.mxu0 %v3351
    %3527 = vmatprep.subr.bf16.mxu0 0
    %3528 = vmatpush1.bf16.msra.mxu0 %v3350
    %3529 = vmatprep.subr.bf16.mxu0 0
    %3530 = vmatpush1.bf16.msra.mxu0 %v3349
    %3531 = vmatprep.subr.bf16.mxu0 0
    %3532 = vmatpush1.bf16.msra.mxu0 %v3348
    %3533 = vmatprep.subr.bf16.mxu0 0
    %3534 = vmatpush1.bf16.msra.mxu0 %v3347
    %3535 = vmatprep.subr.bf16.mxu0 0
    %3536 = vmatpush1.bf16.msra.mxu0 %v3346
    %3537 = vmatprep.subr.bf16.mxu0 0
    %3538 = vmatpush1.bf16.msra.mxu0 %v3345
    %3539 = vmatprep.subr.bf16.mxu0 0
    %3540 = vmatpush2.bf16.msra.mxu0 %v3360
    %3541 = vmatprep.subr.bf16.mxu0 0
    %3542 = vmatpush2.bf16.msra.mxu0 %v3359
    %3543 = vmatprep.subr.bf16.mxu0 0
    %3544 = vmatpush2.bf16.msra.mxu0 %v3358
    %3545 = vmatprep.subr.bf16.mxu0 0
    %3546 = vmatpush2.bf16.msra.mxu0 %v3357
    %3547 = vmatprep.subr.bf16.mxu0 0
    %3548 = vmatpush2.bf16.msra.mxu0 %v3356
    %3549 = vmatprep.subr.bf16.mxu0 0
    %3550 = vmatpush2.bf16.msra.mxu0 %v3355
    %3551 = vmatprep.subr.bf16.mxu0 0
    %3552 = vmatpush2.bf16.msra.mxu0 %v3354
    %3553 = vmatprep.subr.bf16.mxu0 0
    %3554 = vmatpush2.bf16.msra.mxu0 %v3353
    %3555 = vmatprep.mubr.bf16.mxu0 %v3046
    %3556 = vmatmul.mubr.bf16.gmra.mxu0 %v3045
    %v3557 = vpop.f32.mrf.mxu0
    %v3558 = vadd.f32 %v3517, %v3557
    %v3559 = vpop.f32.mrf.mxu0
    %v3560 = vpop.f32.mrf.mxu0
    %v3561 = vadd.f32 %v3520, %v3560
    %v3562 = vpop.f32.mrf.mxu0
    %3563 = vdwg.mxu0
    %3564 = vmatprep.subr.bf16.mxu0 0
    %3565 = vmatpush1.bf16.msra.mxu0 %v3368
    %3566 = vmatprep.subr.bf16.mxu0 0
    %3567 = vmatpush1.bf16.msra.mxu0 %v3367
    %3568 = vmatprep.subr.bf16.mxu0 0
    %3569 = vmatpush1.bf16.msra.mxu0 %v3366
    %3570 = vmatprep.subr.bf16.mxu0 0
    %3571 = vmatpush1.bf16.msra.mxu0 %v3365
    %3572 = vmatprep.subr.bf16.mxu0 0
    %3573 = vmatpush1.bf16.msra.mxu0 %v3364
    %3574 = vmatprep.subr.bf16.mxu0 0
    %3575 = vmatpush1.bf16.msra.mxu0 %v3363
    %3576 = vmatprep.subr.bf16.mxu0 0
    %3577 = vmatpush1.bf16.msra.mxu0 %v3362
    %3578 = vmatprep.subr.bf16.mxu0 0
    %3579 = vmatpush1.bf16.msra.mxu0 %v3361
    %3580 = vmatprep.subr.bf16.mxu0 0
    %3581 = vmatpush2.bf16.msra.mxu0 %v3376
    %3582 = vmatprep.subr.bf16.mxu0 0
    %3583 = vmatpush2.bf16.msra.mxu0 %v3375
    %3584 = vmatprep.subr.bf16.mxu0 0
    %3585 = vmatpush2.bf16.msra.mxu0 %v3374
    %3586 = vmatprep.subr.bf16.mxu0 0
    %3587 = vmatpush2.bf16.msra.mxu0 %v3373
    %3588 = vmatprep.subr.bf16.mxu0 0
    %3589 = vmatpush2.bf16.msra.mxu0 %v3372
    %3590 = vmatprep.subr.bf16.mxu0 0
    %3591 = vmatpush2.bf16.msra.mxu0 %v3371
    %3592 = vmatprep.subr.bf16.mxu0 0
    %3593 = vmatpush2.bf16.msra.mxu0 %v3370
    %3594 = vmatprep.subr.bf16.mxu0 0
    %3595 = vmatpush2.bf16.msra.mxu0 %v3369
    %3596 = vmatprep.mubr.bf16.mxu0 %v3048
    %3597 = vmatmul.mubr.bf16.gmra.mxu0 %v3047
    %v3598 = vpop.f32.mrf.mxu0
    %v3599 = vadd.f32 %v3558, %v3598
    %v3600 = vpop.f32.mrf.mxu0
    %v3601 = vpop.f32.mrf.mxu0
    %v3602 = vadd.f32 %v3561, %v3601
    %v3603 = vpop.f32.mrf.mxu0
    %3604 = vdwg.mxu0
    %v3605 = vtanh.pop %v3599
    %v3606 = vtanh.pop %v3602
    %3607 = vst [vmem:[#allocation14] sm:$0xff] %v3605
    %3608 = vst [vmem:[#allocation14 + $0x8] sm:$0xff] %v3606
    // Predicated region
    $region66: #{tpu_custom_call.1} parent=1 // pred_check
      _
    $region67: #{tpu_custom_call.1} parent=1 // pred_check_branch
      %3610 = sbr.rel (0) target = $region69
    $region68: #{tpu_custom_call.1} parent=1 // pred_region
      %s3612 = ssub.s32 256, 256
      %3613 = vsyncadd [#allocation5], %s3612
      %s3614 = sshll.u32 [#allocation14], 4
      %s3615 = int_to_ptr.vmem [resolvable:$true] %s3614
      %3620 = dma.vmem_to_hbm [thread:$0]  %s3615, 256, %s9, [#allocation5], 128, 128, 8
    $region69: #{tpu_custom_call.1} parent=1 // pred_fallthru
      _
    // Predicated region
    $region70: #{tpu_custom_call.1} parent=1 // pred_check
      _
    $region71: #{tpu_custom_call.1} parent=1 // pred_check_branch
      %3622 = sbr.rel (0) target = $region73
    $region72: #{tpu_custom_call.1} parent=1 // pred_region
      %3623 = dma.done [#allocation5], 256
    $region73: #{tpu_custom_call.1} parent=1 // pred_fallthru
      _
    %3624 = vsyncpa [#allocation4], 1
    %3625 = vsyncpa [#allocation7], 1
    %3626 = vsyncpa [#allocation10], 1
    %3627 = vsyncpa [#allocation13], 1
    %3628 = vsyncpa [#allocation5], 1

</llo_original>
